<compile_context>
chip_gen: v7x
topology: tpu7x:2x2x1
jax: 0.10.0
libtpu: 0.0.40
codegen_flags: <defaults>
</compile_context>

<pallas_src>
import functools
import math

import jax
import jax.numpy as jnp
from jax.experimental import pallas as pl
from jax.experimental.pallas import tpu as pltpu


_ROW_TILE_MAX = 1024
_ROW_TILES = (1024, 512, 256, 128, 64, 32, 16, 8)
_LANE_TILES = (512, 256, 128)


@functools.lru_cache(maxsize=1)
def _vmem_limit():
    # Generation-aware scoped-VMEM cap: headroom on v7x (64 MiB physical),
    # larger DMA-amortizing budget on v5e/v6e (128 MiB physical).
    try:
        cap = int(pltpu.get_tpu_info().vmem_capacity_bytes)
    except Exception:
        return 32 * 1024 * 1024
    if cap <= 64 * 1024 * 1024:
        return 40 * 1024 * 1024
    return 64 * 1024 * 1024


def _round_up(x, m):
    return ((x + m - 1) // m) * m


def _pick_row_tile(m):
    # Biggest row tile that fits: whole M if small (amortizes weight streaming),
    # else the largest divisor from the candidate list (M is a multiple of 16
    # by construction in this model).
    if m <= _ROW_TILE_MAX:
        return m
    for c in _ROW_TILES:
        if m % c == 0:
            return c
    return m


def _pick_lane_tile(n):
    for c in _LANE_TILES:
        if n % c == 0:
            return c
    return n  # full-dim block is always legal


# ----------------------------- in-kernel math helpers -----------------------------

_INV_SQRT2 = 1.0 / math.sqrt(2.0)


def _erf(x):
    # Abramowitz & Stegun 7.1.26 (|error| < 1.5e-7): exp + polynomials only,
    # guaranteed to lower in Mosaic.
    a1, a2, a3, a4, a5 = 0.254829592, -0.284496736, 1.421413741, -1.453152027, 1.061405429
    p = 0.3275911
    sgn = jnp.where(x >= 0.0, 1.0, -1.0)
    ax = jnp.abs(x)
    t = 1.0 / (1.0 + p * ax)
    poly = ((((a5 * t + a4) * t + a3) * t + a2) * t + a1) * t
    return sgn * (1.0 - poly * jnp.exp(-ax * ax))


def _gelu(x):
    return 0.5 * x * (1.0 + _erf(x * _INV_SQRT2))


# ----------------------------- Pallas kernels ------------------------------

def _linear_kernel(x_ref, w_ref, b_ref, o_ref, acc_ref):
    k = pl.program_id(2)

    @pl.when(k == 0)
    def _():
        acc_ref[...] = jnp.zeros_like(acc_ref)

    acc_ref[...] += jnp.dot(x_ref[...].astype(jnp.bfloat16), w_ref[...],
                            preferred_element_type=jnp.float32)

    @pl.when(k == pl.num_programs(2) - 1)
    def _():
        o_ref[...] = (acc_ref[...] + b_ref[...]).astype(o_ref.dtype)


def _linear_residual_kernel(x_ref, w_ref, b_ref, r_ref, o_ref, acc_ref):
    k = pl.program_id(2)

    @pl.when(k == 0)
    def _():
        acc_ref[...] = jnp.zeros_like(acc_ref)

    acc_ref[...] += jnp.dot(x_ref[...].astype(jnp.bfloat16), w_ref[...],
                            preferred_element_type=jnp.float32)

    @pl.when(k == pl.num_programs(2) - 1)
    def _():
        o_ref[...] = (acc_ref[...] + b_ref[...] + r_ref[...]).astype(o_ref.dtype)


def _ln_linear_kernel(x_ref, g_ref, bln_ref, w_ref, b_ref, o_ref, h_ref,
                      *, eps, activation):
    # LayerNorm prologue (fp32 stats) computed once per row-tile (j == 0) and
    # cached in a bf16 VMEM scratch; reused for every N-tile of the same rows.
    j = pl.program_id(1)

    @pl.when(j == 0)
    def _():
        x = x_ref[...].astype(jnp.float32)
        mean = jnp.mean(x, axis=-1, keepdims=True)
        var = jnp.mean(jnp.square(x - mean), axis=-1, keepdims=True)
        h = (x - mean) * jax.lax.rsqrt(var + eps) * g_ref[...] + bln_ref[...]
        h_ref[...] = h.astype(jnp.bfloat16)

    acc = jnp.dot(h_ref[...], w_ref[...], preferred_element_type=jnp.float32)
    acc = acc + b_ref[...]
    if activation == "gelu":
        acc = _gelu(acc)
    o_ref[...] = acc.astype(o_ref.dtype)


def _layernorm_kernel(x_ref, g_ref, b_ref, o_ref, *, eps):
    x = x_ref[...].astype(jnp.float32)
    mean = jnp.mean(x, axis=-1, keepdims=True)
    var = jnp.mean(jnp.square(x - mean), axis=-1, keepdims=True)
    o_ref[...] = ((x - mean) * jax.lax.rsqrt(var + eps) * g_ref[...] + b_ref[...]
                  ).astype(o_ref.dtype)


def _attention_head_kernel(q_ref, k_ref, v_ref, o_ref, *, s_real):
    # One (batch, head) per grid step.  q/k/v blocks are (1, 1, S_pad, dh) with
    # full last two dims (no lane-offset slicing, no K transpose materialized).
    # 1/sqrt(dh) is already folded into the q projection weights.
    s_pad = q_ref.shape[2]
    q = q_ref[0, 0]
    k = k_ref[0, 0]
    v = v_ref[0, 0]

    s = jax.lax.dot_general(q, k, (((1,), (1,)), ((), ())),
                            preferred_element_type=jnp.float32)      # (S_pad, S_pad)
    if s_real < s_pad:
        col = jax.lax.broadcasted_iota(jnp.int32, s.shape, 1)
        s = jnp.where(col < s_real, s, jnp.float32(-1e30))
    m = jnp.max(s, axis=-1, keepdims=True)
    e = jnp.exp(s - m)
    denom = jnp.sum(e, axis=-1, keepdims=True)
    p = (e * pl.reciprocal(denom, approx=True)).astype(jnp.bfloat16)
    o_ref[0, 0] = jnp.dot(p, v, preferred_element_type=jnp.float32).astype(o_ref.dtype)


# ----------------------------- kernel wrappers ------------------------------

def linear(x, w, b, *, out_dtype=jnp.bfloat16):
    M, K = x.shape
    N = w.shape[1]
    tm = _pick_row_tile(M)
    tn = _pick_lane_tile(N)
    tk = _pick_lane_tile(K)
    grid = (M // tm, N // tn, K // tk)
    cost = pl.CostEstimate(
        flops=2 * M * N * K, transcendentals=0,
        bytes_accessed=int(x.size * x.dtype.itemsize + w.size * w.dtype.itemsize
                           + M * N * jnp.dtype(out_dtype).itemsize))
    return pl.pallas_call(
        _linear_kernel,
        out_shape=jax.ShapeDtypeStruct((M, N), out_dtype),
        grid=grid,
        in_specs=[
            pl.BlockSpec((tm, tk), lambda i, j, k: (i, k)),
            pl.BlockSpec((tk, tn), lambda i, j, k: (k, j)),
            pl.BlockSpec((1, tn), lambda i, j, k: (0, j)),
        ],
        out_specs=pl.BlockSpec((tm, tn), lambda i, j, k: (i, j)),
        scratch_shapes=[pltpu.VMEM((tm, tn), jnp.float32)],
        compiler_params=pltpu.CompilerParams(
            dimension_semantics=("parallel", "parallel", "arbitrary"),
            vmem_limit_bytes=_vmem_limit()),
        cost_estimate=cost,
    )(x, w, b)


def linear_residual(x, w, b, residual, *, out_dtype=jnp.bfloat16):
    M, K = x.shape
    N = w.shape[1]
    tm = _pick_row_tile(M)
    tn = _pick_lane_tile(N)
    tk = _pick_lane_tile(K)
    grid = (M // tm, N // tn, K // tk)
    cost = pl.CostEstimate(
        flops=2 * M * N * K, transcendentals=0,
        bytes_accessed=int(x.size * x.dtype.itemsize + w.size * w.dtype.itemsize
                           + residual.size * residual.dtype.itemsize
                           + M * N * jnp.dtype(out_dtype).itemsize))
    return pl.pallas_call(
        _linear_residual_kernel,
        out_shape=jax.ShapeDtypeStruct((M, N), out_dtype),
        grid=grid,
        in_specs=[
            pl.BlockSpec((tm, tk), lambda i, j, k: (i, k)),
            pl.BlockSpec((tk, tn), lambda i, j, k: (k, j)),
            pl.BlockSpec((1, tn), lambda i, j, k: (0, j)),
            pl.BlockSpec((tm, tn), lambda i, j, k: (i, j)),
        ],
        out_specs=pl.BlockSpec((tm, tn), lambda i, j, k: (i, j)),
        scratch_shapes=[pltpu.VMEM((tm, tn), jnp.float32)],
        compiler_params=pltpu.CompilerParams(
            dimension_semantics=("parallel", "parallel", "arbitrary"),
            vmem_limit_bytes=_vmem_limit()),
        cost_estimate=cost,
    )(x, w, b, residual)


def ln_linear(x, gamma, beta, w, b, *, activation=None,
              out_dtype=jnp.bfloat16, eps=1e-12):
    # LayerNorm is over the full K dim, so K stays un-tiled (K <= ~1.5k for ViT).
    # N axis is "arbitrary" so the normalized (tm, K) tile cached at j == 0 is
    # reused for every N-tile of the same rows.
    M, K = x.shape
    N = w.shape[1]
    tm = _pick_row_tile(M)
    tn = _pick_lane_tile(N)
    grid = (M // tm, N // tn)
    kernel = functools.partial(_ln_linear_kernel, eps=eps, activation=activation)
    cost = pl.CostEstimate(
        flops=2 * M * N * K,
        transcendentals=(M * N if activation == "gelu" else 0),
        bytes_accessed=int(x.size * x.dtype.itemsize + w.size * w.dtype.itemsize
                           + M * N * jnp.dtype(out_dtype).itemsize))
    return pl.pallas_call(
        kernel,
        out_shape=jax.ShapeDtypeStruct((M, N), out_dtype),
        grid=grid,
        in_specs=[
            pl.BlockSpec((tm, K), lambda i, j: (i, 0)),
            pl.BlockSpec((1, K), lambda i, j: (0, 0)),
            pl.BlockSpec((1, K), lambda i, j: (0, 0)),
            pl.BlockSpec((K, tn), lambda i, j: (0, j)),
            pl.BlockSpec((1, tn), lambda i, j: (0, j)),
        ],
        out_specs=pl.BlockSpec((tm, tn), lambda i, j: (i, j)),
        scratch_shapes=[pltpu.VMEM((tm, K), jnp.bfloat16)],
        compiler_params=pltpu.CompilerParams(
            dimension_semantics=("parallel", "arbitrary"),
            vmem_limit_bytes=_vmem_limit()),
        cost_estimate=cost,
    )(x, gamma, beta, w, b)


def layernorm(x, gamma, beta, eps=1e-12):
    M, D = x.shape
    tm = _pick_row_tile(M)
    kernel = functools.partial(_layernorm_kernel, eps=eps)
    return pl.pallas_call(
        kernel,
        out_shape=jax.ShapeDtypeStruct((M, D), jnp.float32),
        grid=(M // tm,),
        in_specs=[
            pl.BlockSpec((tm, D), lambda i: (i, 0)),
            pl.BlockSpec((1, D), lambda i: (0, 0)),
            pl.BlockSpec((1, D), lambda i: (0, 0)),
        ],
        out_specs=pl.BlockSpec((tm, D), lambda i: (i, 0)),
        compiler_params=pltpu.CompilerParams(
            dimension_semantics=("parallel",),
            vmem_limit_bytes=_vmem_limit()),
    )(x, gamma, beta)


def attention(qkv, *, num_heads, head_dim, s_real):
    # qkv: (B, S_pad, 3*D) bf16.  Split to head-major (B, NH, S_pad, dh) once in
    # XLA (cheap relayout), run a (B, NH) parallel grid with full-last-dim blocks,
    # then merge back with one transpose.  -> ctx (B, S_pad, D) bf16.
    B, S_pad, _ = qkv.shape
    D = num_heads * head_dim
    qkv_h = qkv.reshape(B, S_pad, 3, num_heads, head_dim)
    qkv_h = jnp.transpose(qkv_h, (2, 0, 3, 1, 4))          # (3, B, NH, S_pad, dh)
    q, k, v = qkv_h[0], qkv_h[1], qkv_h[2]

    kernel = functools.partial(_attention_head_kernel, s_real=s_real)
    blk = pl.BlockSpec((1, 1, S_pad, head_dim), lambda b, h: (b, h, 0, 0))
    ctx = pl.pallas_call(
        kernel,
        out_shape=jax.ShapeDtypeStruct((B, num_heads, S_pad, head_dim), jnp.bfloat16),
        grid=(B, num_heads),
        in_specs=[blk, blk, blk],
        out_specs=blk,
        compiler_params=pltpu.CompilerParams(
            dimension_semantics=("parallel", "parallel"),
            vmem_limit_bytes=_vmem_limit()),
    )(q, k, v)
    return jnp.transpose(ctx, (0, 2, 1, 3)).reshape(B, S_pad, D)


# ----------------------------- params ------------------------------

def init_params(key, *, C, P, D, NH, LAYERS, MLP, N):
    """Weights stored in matmul-ready form: pre-reshaped/transposed, bf16,
    biases pre-shaped (1, n), attention scale folded into the q columns."""
    scale = 0.02
    DH = D // NH
    attn_scale = 1.0 / math.sqrt(DH)
    keys = jax.random.split(key, 3 + LAYERS)

    conv_w = scale * jax.random.normal(keys[0], (D, C, P, P), jnp.float32)
    params = {
        "patch": P, "hidden": D, "heads": NH,
        "patch_w": conv_w.reshape(D, C * P * P).T.astype(jnp.bfloat16),  # (C*P*P, D)
        "patch_b": jnp.zeros((1, D), jnp.float32),
        "cls": scale * jax.random.normal(keys[1], (1, 1, D), jnp.float32),
        "pos": scale * jax.random.normal(keys[2], (1, N + 1, D), jnp.float32),
        "lnf_g": jnp.ones((1, D), jnp.float32),
        "lnf_b": jnp.zeros((1, D), jnp.float32),
        "layers": [],
    }
    for l in range(LAYERS):
        k = jax.random.split(keys[3 + l], 4)
        qkv_w = scale * jax.random.normal(k[0], (D, 3 * D), jnp.float32)
        qkv_b = jnp.zeros((3 * D,), jnp.float32)
        col_scale = jnp.concatenate([jnp.full((D,), attn_scale, jnp.float32),
                                     jnp.ones((2 * D,), jnp.float32)])
        qkv_w = qkv_w * col_scale[None, :]
        qkv_b = qkv_b * col_scale
        params["layers"].append({
            "ln1_g": jnp.ones((1, D), jnp.float32),
            "ln1_b": jnp.zeros((1, D), jnp.float32),
            "qkv_w": qkv_w.astype(jnp.bfloat16),
            "qkv_b": qkv_b.reshape(1, 3 * D),
            "proj_w": (scale * jax.random.normal(k[1], (D, D), jnp.float32)
                       ).astype(jnp.bfloat16),
            "proj_b": jnp.zeros((1, D), jnp.float32),
            "ln2_g": jnp.ones((1, D), jnp.float32),
            "ln2_b": jnp.zeros((1, D), jnp.float32),
            "fc1_w": (scale * jax.random.normal(k[2], (D, MLP), jnp.float32)
                      ).astype(jnp.bfloat16),
            "fc1_b": jnp.zeros((1, MLP), jnp.float32),
            "fc2_w": (scale * jax.random.normal(k[3], (MLP, D), jnp.float32)
                      ).astype(jnp.bfloat16),
            "fc2_b": jnp.zeros((1, D), jnp.float32),
        })
    return params


# ----------------------------- ViT forward ------------------------------

def image_encoder_forward(params, pixel_values):
    """pixel_values: (B, C, H, W) float32, NCHW as in PyTorch."""
    B, C, IMG, _ = pixel_values.shape
    P = params["patch"]
    D = params["hidden"]
    NH = params["heads"]
    DH = D // NH
    Hn = IMG // P
    N = Hn * Hn
    S = N + 1
    S_pad = _round_up(S, 16)          # bf16 sublane pack = 16 rows

    # --- patch embedding: conv(stride=P) == patch-extract (glue) + Pallas matmul ---
    patches = pixel_values.reshape(B, C, Hn, P, Hn, P)
    patches = patches.transpose(0, 2, 4, 1, 3, 5).reshape(B * N, C * P * P)
    patches = patches.astype(jnp.bfloat16)                 # halve patch-matrix DMA
    x = linear(patches, params["patch_w"], params["patch_b"],
               out_dtype=jnp.bfloat16)                      # (B*N, D) bf16
    x = x.reshape(B, N, D)

    # --- [CLS] + position embeddings (fp32), one-time pad to S_pad (glue) ---
    cls = jnp.broadcast_to(params["cls"], (B, 1, D))
    x = jnp.concatenate([cls, x.astype(jnp.float32)], axis=1) + params["pos"]
    if S_pad > S:
        x = jnp.concatenate([x, jnp.zeros((B, S_pad - S, D), x.dtype)], axis=1)

    M = B * S_pad
    x2d = x.reshape(M, D).astype(jnp.bfloat16)              # bf16 residual stream

    for layer in params["layers"]:
        # pre-LN self-attention (LN fused into QKV matmul; scale folded into weights)
        qkv = ln_linear(x2d, layer["ln1_g"], layer["ln1_b"],
                        layer["qkv_w"], layer["qkv_b"],
                        out_dtype=jnp.bfloat16)             # (M, 3D) bf16
        ctx = attention(qkv.reshape(B, S_pad, 3 * D),
                        num_heads=NH, head_dim=DH, s_real=S)  # (B, S_pad, D) bf16
        x2d = linear_residual(ctx.reshape(M, D),
                              layer["proj_w"], layer["proj_b"], x2d,
                              out_dtype=jnp.bfloat16)

        # pre-LN MLP (LN fused into FC1; exact erf-GELU)
        m = ln_linear(x2d, layer["ln2_g"], layer["ln2_b"],
                      layer["fc1_w"], layer["fc1_b"],
                      activation="gelu", out_dtype=jnp.bfloat16)  # (M, MLP) bf16
        x2d = linear_residual(m, layer["fc2_w"], layer["fc2_b"], x2d,
                              out_dtype=jnp.bfloat16)

    # --- final LayerNorm -> last_hidden_state (fp32, strip pad) ---
    out = layernorm(x2d, params["lnf_g"], params["lnf_b"])
    return out.reshape(B, S_pad, D)[:, :S, :]


# ----------------------------- main ------------------------------

if __name__ == "__main__":
    # Small ViT config: 16x16 images, 3 channels, patch 8 -> 4 patches (+CLS = 5
    # tokens, padded to 16), hidden 32, 4 heads (dh=8), 2 layers, MLP 64.
    B, C, IMG, P = 2, 3, 16, 8
    D, NH, LAYERS, MLP = 32, 4, 2, 64
    N = (IMG // P) ** 2

    root = jax.random.PRNGKey(0)
    k_params, k_x = jax.random.split(root)
    params = init_params(k_params, C=C, P=P, D=D, NH=NH, LAYERS=LAYERS, MLP=MLP, N=N)

    pixel_values = jax.random.normal(k_x, (B, C, IMG, IMG), jnp.float32)  # NCHW

    fwd = jax.jit(lambda pv: image_encoder_forward(params, pv))
    last_hidden_state = fwd(pixel_values)
    jax.block_until_ready(last_hidden_state)
    assert last_hidden_state.shape == (B, N + 1, D)
    assert bool(jnp.all(jnp.isfinite(last_hidden_state)))
    print("KERNEL_OK")
</pallas_src>

<mosaic_0001>
module attributes {stable_mosaic.version = 11 : i64} {
  func.func @_linear_kernel(%arg0: i32, %arg1: i32, %arg2: i32, %arg3: memref<8x192xbf16, #tpu.memory_space<vmem>>, %arg4: memref<192x32xbf16, #tpu.memory_space<vmem>>, %arg5: memref<1x32xf32, #tpu.memory_space<vmem>>, %arg6: memref<8x32xbf16, #tpu.memory_space<vmem>>, %arg7: memref<8x32xf32, #tpu.memory_space<vmem>>) attributes {dimension_semantics = [#tpu.dimension_semantics<parallel>, #tpu.dimension_semantics<parallel>, #tpu.dimension_semantics<arbitrary>], iteration_bounds = array<i64: 1, 1, 1>, scalar_prefetch = 0 : i64, scratch_operands = 1 : i64, tpu.core_type = #tpu.core_type<tc>, window_params = [{transform_indices = @transform_0, window_bounds = array<i64: 8, 192>}, {transform_indices = @transform_1, window_bounds = array<i64: 192, 32>}, {transform_indices = @transform_2, window_bounds = array<i64: 1, 32>}, {transform_indices = @transform_3, window_bounds = array<i64: 8, 32>}]} {
    %c0_i32 = arith.constant 0 : i32
    %0 = arith.cmpi eq, %arg2, %c0_i32 : i32
    %1 = arith.extui %0 : i1 to i32
    %c0_i32_0 = arith.constant 0 : i32
    %2 = arith.cmpi ne, %1, %c0_i32_0 : i32
    scf.if %2 {
      %cst_10 = arith.constant 0.000000e+00 : f32
      %12 = vector.broadcast %cst_10 : f32 to vector<8x32xf32>
      %c0_11 = arith.constant 0 : index
      %c0_12 = arith.constant 0 : index
      %13 = vector.load %arg7[%c0_11, %c0_12] : memref<8x32xf32, #tpu.memory_space<vmem>>, vector<8x32xf32>
      tpu.vector_store %arg7[%c0_11, %c0_12], %12 {strides = array<i32>} : memref<8x32xf32, #tpu.memory_space<vmem>>, vector<8x32xf32>,
    } else {
    }
    %c0 = arith.constant 0 : index
    %c0_1 = arith.constant 0 : index
    %3 = vector.load %arg7[%c0, %c0_1] : memref<8x32xf32, #tpu.memory_space<vmem>>, vector<8x32xf32>
    %c0_2 = arith.constant 0 : index
    %c0_3 = arith.constant 0 : index
    %4 = vector.load %arg3[%c0_2, %c0_3] : memref<8x192xbf16, #tpu.memory_space<vmem>>, vector<8x192xbf16>
    %c0_4 = arith.constant 0 : index
    %c0_5 = arith.constant 0 : index
    %5 = vector.load %arg4[%c0_4, %c0_5] : memref<192x32xbf16, #tpu.memory_space<vmem>>, vector<192x32xbf16>
    %cst = arith.constant dense<0.000000e+00> : vector<8x32xf32>
    %6 = tpu.matmul %4, %5, %cst {dimension_numbers = #tpu.dot_dimension_numbers<[1], [0], [0], [1], [0, 0, 1, 1], [], []>} : vector<8x192xbf16>, vector<192x32xbf16>, vector<8x32xf32> -> vector<8x32xf32>
    %7 = arith.addf %3, %6 : vector<8x32xf32>
    %c0_6 = arith.constant 0 : index
    %c0_7 = arith.constant 0 : index
    %8 = vector.load %arg7[%c0_6, %c0_7] : memref<8x32xf32, #tpu.memory_space<vmem>>, vector<8x32xf32>
    tpu.vector_store %arg7[%c0_6, %c0_7], %7 {strides = array<i32>} : memref<8x32xf32, #tpu.memory_space<vmem>>, vector<8x32xf32>,
    %c0_i32_8 = arith.constant 0 : i32
    %9 = arith.cmpi eq, %arg2, %c0_i32_8 : i32
    %10 = arith.extui %9 : i1 to i32
    %c0_i32_9 = arith.constant 0 : i32
    %11 = arith.cmpi ne, %10, %c0_i32_9 : i32
    scf.if %11 {
      %c0_10 = arith.constant 0 : index
      %c0_11 = arith.constant 0 : index
      %12 = vector.load %arg7[%c0_10, %c0_11] : memref<8x32xf32, #tpu.memory_space<vmem>>, vector<8x32xf32>
      %c0_12 = arith.constant 0 : index
      %c0_13 = arith.constant 0 : index
      %13 = vector.load %arg5[%c0_12, %c0_13] : memref<1x32xf32, #tpu.memory_space<vmem>>, vector<1x32xf32>
      %14 = vector.broadcast %13 : vector<1x32xf32> to vector<8x32xf32>
      %15 = arith.addf %12, %14 : vector<8x32xf32>
      %16 = arith.truncf %15 : vector<8x32xf32> to vector<8x32xbf16>
      %c0_14 = arith.constant 0 : index
      %c0_15 = arith.constant 0 : index
      %17 = vector.load %arg6[%c0_14, %c0_15] : memref<8x32xbf16, #tpu.memory_space<vmem>>, vector<8x32xbf16>
      tpu.vector_store %arg6[%c0_14, %c0_15], %16 {strides = array<i32>} : memref<8x32xbf16, #tpu.memory_space<vmem>>, vector<8x32xbf16>,
    } else {
    }
    return
  }
  func.func @transform_0(%arg0: i32, %arg1: i32, %arg2: i32) -> (i32, i32) {
    %c0_i32 = arith.constant 0 : i32
    return %arg0, %arg2 : i32, i32
  }
  func.func @transform_1(%arg0: i32, %arg1: i32, %arg2: i32) -> (i32, i32) {
    %c0_i32 = arith.constant 0 : i32
    return %arg2, %arg1 : i32, i32
  }
  func.func @transform_2(%arg0: i32, %arg1: i32, %arg2: i32) -> (i32, i32) {
    %c0_i32 = arith.constant 0 : i32
    %c0_i32_0 = arith.constant 0 : i32
    return %c0_i32, %arg1 : i32, i32
  }
  func.func @transform_3(%arg0: i32, %arg1: i32, %arg2: i32) -> (i32, i32) {
    %c0_i32 = arith.constant 0 : i32
    return %arg0, %arg1 : i32, i32
  }
}

module attributes {stable_mosaic.version = 11 : i64} {
  func.func @_ln_linear_kernel(%arg0: i32, %arg1: i32, %arg2: memref<32x32xbf16, #tpu.memory_space<vmem>>, %arg3: memref<1x32xf32, #tpu.memory_space<vmem>>, %arg4: memref<1x32xf32, #tpu.memory_space<vmem>>, %arg5: memref<32x96xbf16, #tpu.memory_space<vmem>>, %arg6: memref<1x96xf32, #tpu.memory_space<vmem>>, %arg7: memref<32x96xbf16, #tpu.memory_space<vmem>>, %arg8: memref<32x32xbf16, #tpu.memory_space<vmem>>) attributes {dimension_semantics = [#tpu.dimension_semantics<parallel>, #tpu.dimension_semantics<arbitrary>], iteration_bounds = array<i64: 1, 1>, scalar_prefetch = 0 : i64, scratch_operands = 1 : i64, tpu.core_type = #tpu.core_type<tc>, window_params = [{transform_indices = @transform_0, window_bounds = array<i64: 32, 32>}, {pipeline_mode = #tpu.pipeline_mode<synchronous>, transform_indices = @transform_1, window_bounds = array<i64: 1, 32>}, {pipeline_mode = #tpu.pipeline_mode<synchronous>, transform_indices = @transform_2, window_bounds = array<i64: 1, 32>}, {transform_indices = @transform_3, window_bounds = array<i64: 32, 96>}, {transform_indices = @transform_4, window_bounds = array<i64: 1, 96>}, {transform_indices = @transform_5, window_bounds = array<i64: 32, 96>}]} {
    %c0_i32 = arith.constant 0 : i32
    %0 = arith.cmpi eq, %arg1, %c0_i32 : i32
    %1 = arith.extui %0 : i1 to i32
    %c0_i32_0 = arith.constant 0 : i32
    %2 = arith.cmpi ne, %1, %c0_i32_0 : i32
    scf.if %2 {
      %c0_8 = arith.constant 0 : index
      %c0_9 = arith.constant 0 : index
      %11 = vector.load %arg2[%c0_8, %c0_9] : memref<32x32xbf16, #tpu.memory_space<vmem>>, vector<32x32xbf16>
      %12 = arith.extf %11 : vector<32x32xbf16> to vector<32x32xf32>
      %cst_10 = arith.constant dense<0.000000e+00> : vector<32xf32>
      %13 = vector.multi_reduction <add>, %12, %cst_10 [1] : vector<32x32xf32> to vector<32xf32>
      %14 = vector.shape_cast %13 : vector<32xf32> to vector<32x1xf32>
      %cst_11 = arith.constant 3.200000e+01 : f32
      %15 = vector.broadcast %cst_11 : f32 to vector<32x1xf32>
      %16 = arith.divf %14, %15 : vector<32x1xf32>
      %17 = vector.broadcast %16 : vector<32x1xf32> to vector<32x32xf32>
      %18 = arith.subf %12, %17 : vector<32x32xf32>
      %19 = arith.mulf %18, %18 : vector<32x32xf32>
      %cst_12 = arith.constant dense<0.000000e+00> : vector<32xf32>
      %20 = vector.multi_reduction <add>, %19, %cst_12 [1] : vector<32x32xf32> to vector<32xf32>
      %21 = vector.shape_cast %20 : vector<32xf32> to vector<32x1xf32>
      %cst_13 = arith.constant 3.200000e+01 : f32
      %22 = vector.broadcast %cst_13 : f32 to vector<32x1xf32>
      %23 = arith.divf %21, %22 : vector<32x1xf32>
      %24 = vector.broadcast %16 : vector<32x1xf32> to vector<32x32xf32>
      %25 = arith.subf %12, %24 : vector<32x32xf32>
      %cst_14 = arith.constant 9.99999996E-13 : f32
      %26 = vector.broadcast %cst_14 : f32 to vector<32x1xf32>
      %27 = arith.addf %23, %26 : vector<32x1xf32>
      %28 = math.rsqrt %27 : vector<32x1xf32>
      %29 = vector.broadcast %28 : vector<32x1xf32> to vector<32x32xf32>
      %30 = arith.mulf %25, %29 : vector<32x32xf32>
      %c0_15 = arith.constant 0 : index
      %c0_16 = arith.constant 0 : index
      %31 = vector.load %arg3[%c0_15, %c0_16] : memref<1x32xf32, #tpu.memory_space<vmem>>, vector<1x32xf32>
      %32 = vector.broadcast %31 : vector<1x32xf32> to vector<32x32xf32>
      %33 = arith.mulf %30, %32 : vector<32x32xf32>
      %c0_17 = arith.constant 0 : index
      %c0_18 = arith.constant 0 : index
      %34 = vector.load %arg4[%c0_17, %c0_18] : memref<1x32xf32, #tpu.memory_space<vmem>>, vector<1x32xf32>
      %35 = vector.broadcast %34 : vector<1x32xf32> to vector<32x32xf32>
      %36 = arith.addf %33, %35 : vector<32x32xf32>
      %37 = arith.truncf %36 : vector<32x32xf32> to vector<32x32xbf16>
      %c0_19 = arith.constant 0 : index
      %c0_20 = arith.constant 0 : index
      %38 = vector.load %arg8[%c0_19, %c0_20] : memref<32x32xbf16, #tpu.memory_space<vmem>>, vector<32x32xbf16>
      tpu.vector_store %arg8[%c0_19, %c0_20], %37 {strides = array<i32>} : memref<32x32xbf16, #tpu.memory_space<vmem>>, vector<32x32xbf16>,
    } else {
    }
    %c0 = arith.constant 0 : index
    %c0_1 = arith.constant 0 : index
    %3 = vector.load %arg8[%c0, %c0_1] : memref<32x32xbf16, #tpu.memory_space<vmem>>, vector<32x32xbf16>
    %c0_2 = arith.constant 0 : index
    %c0_3 = arith.constant 0 : index
    %4 = vector.load %arg5[%c0_2, %c0_3] : memref<32x96xbf16, #tpu.memory_space<vmem>>, vector<32x96xbf16>
    %cst = arith.constant dense<0.000000e+00> : vector<32x96xf32>
    %5 = tpu.matmul %3, %4, %cst {dimension_numbers = #tpu.dot_dimension_numbers<[1], [0], [0], [1], [0, 0, 1, 1], [], []>} : vector<32x32xbf16>, vector<32x96xbf16>, vector<32x96xf32> -> vector<32x96xf32>
    %c0_4 = arith.constant 0 : index
    %c0_5 = arith.constant 0 : index
    %6 = vector.load %arg6[%c0_4, %c0_5] : memref<1x96xf32, #tpu.memory_space<vmem>>, vector<1x96xf32>
    %7 = vector.broadcast %6 : vector<1x96xf32> to vector<32x96xf32>
    %8 = arith.addf %5, %7 : vector<32x96xf32>
    %9 = arith.truncf %8 : vector<32x96xf32> to vector<32x96xbf16>
    %c0_6 = arith.constant 0 : index
    %c0_7 = arith.constant 0 : index
    %10 = vector.load %arg7[%c0_6, %c0_7] : memref<32x96xbf16, #tpu.memory_space<vmem>>, vector<32x96xbf16>
    tpu.vector_store %arg7[%c0_6, %c0_7], %9 {strides = array<i32>} : memref<32x96xbf16, #tpu.memory_space<vmem>>, vector<32x96xbf16>,
    return
  }
  func.func @transform_0(%arg0: i32, %arg1: i32) -> (i32, i32) {
    %c0_i32 = arith.constant 0 : i32
    %c0_i32_0 = arith.constant 0 : i32
    return %arg0, %c0_i32 : i32, i32
  }
  func.func @transform_1(%arg0: i32, %arg1: i32) -> (i32, i32) {
    %c0_i32 = arith.constant 0 : i32
    %c0_i32_0 = arith.constant 0 : i32
    %c0_i32_1 = arith.constant 0 : i32
    return %c0_i32, %c0_i32_0 : i32, i32
  }
  func.func @transform_2(%arg0: i32, %arg1: i32) -> (i32, i32) {
    %c0_i32 = arith.constant 0 : i32
    %c0_i32_0 = arith.constant 0 : i32
    %c0_i32_1 = arith.constant 0 : i32
    return %c0_i32, %c0_i32_0 : i32, i32
  }
  func.func @transform_3(%arg0: i32, %arg1: i32) -> (i32, i32) {
    %c0_i32 = arith.constant 0 : i32
    %c0_i32_0 = arith.constant 0 : i32
    return %c0_i32, %arg1 : i32, i32
  }
  func.func @transform_4(%arg0: i32, %arg1: i32) -> (i32, i32) {
    %c0_i32 = arith.constant 0 : i32
    %c0_i32_0 = arith.constant 0 : i32
    return %c0_i32, %arg1 : i32, i32
  }
  func.func @transform_5(%arg0: i32, %arg1: i32) -> (i32, i32) {
    %c0_i32 = arith.constant 0 : i32
    return %arg0, %arg1 : i32, i32
  }
}

module attributes {stable_mosaic.version = 11 : i64} {
  func.func @_attention_head_kernel(%arg0: i32, %arg1: i32, %arg2: memref<1x1x16x8xbf16, #tpu.memory_space<vmem>>, %arg3: memref<1x1x16x8xbf16, #tpu.memory_space<vmem>>, %arg4: memref<1x1x16x8xbf16, #tpu.memory_space<vmem>>, %arg5: memref<1x1x16x8xbf16, #tpu.memory_space<vmem>>) attributes {dimension_semantics = [#tpu.dimension_semantics<parallel>, #tpu.dimension_semantics<parallel>], iteration_bounds = array<i64: 2, 4>, scalar_prefetch = 0 : i64, scratch_operands = 0 : i64, tpu.core_type = #tpu.core_type<tc>, window_params = [{transform_indices = @transform_0, window_bounds = array<i64: 1, 1, 16, 8>}, {transform_indices = @transform_1, window_bounds = array<i64: 1, 1, 16, 8>}, {transform_indices = @transform_2, window_bounds = array<i64: 1, 1, 16, 8>}, {transform_indices = @transform_3, window_bounds = array<i64: 1, 1, 16, 8>}]} {
    %c0 = arith.constant 0 : index
    %c0_0 = arith.constant 0 : index
    %c0_1 = arith.constant 0 : index
    %c0_2 = arith.constant 0 : index
    %0 = vector.load %arg2[%c0, %c0_0, %c0_1, %c0_2] : memref<1x1x16x8xbf16, #tpu.memory_space<vmem>>, vector<1x1x16x8xbf16>
    %1 = vector.shape_cast %0 : vector<1x1x16x8xbf16> to vector<16x8xbf16>
    %c0_3 = arith.constant 0 : index
    %c0_4 = arith.constant 0 : index
    %c0_5 = arith.constant 0 : index
    %c0_6 = arith.constant 0 : index
    %2 = vector.load %arg3[%c0_3, %c0_4, %c0_5, %c0_6] : memref<1x1x16x8xbf16, #tpu.memory_space<vmem>>, vector<1x1x16x8xbf16>
    %3 = vector.shape_cast %2 : vector<1x1x16x8xbf16> to vector<16x8xbf16>
    %c0_7 = arith.constant 0 : index
    %c0_8 = arith.constant 0 : index
    %c0_9 = arith.constant 0 : index
    %c0_10 = arith.constant 0 : index
    %4 = vector.load %arg4[%c0_7, %c0_8, %c0_9, %c0_10] : memref<1x1x16x8xbf16, #tpu.memory_space<vmem>>, vector<1x1x16x8xbf16>
    %5 = vector.shape_cast %4 : vector<1x1x16x8xbf16> to vector<16x8xbf16>
    %cst = arith.constant dense<0.000000e+00> : vector<16x16xf32>
    %6 = tpu.matmul %1, %3, %cst {dimension_numbers = #tpu.dot_dimension_numbers<[1], [1], [0], [0], [0, 0, 1, 0], [], []>} : vector<16x8xbf16>, vector<16x8xbf16>, vector<16x16xf32> -> vector<16x16xf32>
    %7 = tpu.iota {dimensions = array<i32: 1>} : vector<16x16xi32>
    %c5_i32 = arith.constant 5 : i32
    %8 = vector.broadcast %c5_i32 : i32 to vector<16x16xi32>
    %9 = arith.cmpi slt, %7, %8 : vector<16x16xi32>
    %cst_11 = arith.constant -1.000000e+30 : f32
    %10 = vector.broadcast %cst_11 : f32 to vector<16x16xf32>
    %11 = arith.select %9, %6, %10 : vector<16x16xi1>, vector<16x16xf32>
    %cst_12 = arith.constant dense<0xFF800000> : vector<16xf32>
    %12 = vector.multi_reduction <maximumf>, %11, %cst_12 [1] : vector<16x16xf32> to vector<16xf32>
    %13 = vector.shape_cast %12 : vector<16xf32> to vector<16x1xf32>
    %14 = vector.broadcast %13 : vector<16x1xf32> to vector<16x16xf32>
    %15 = arith.subf %11, %14 : vector<16x16xf32>
    %16 = math.exp %15 : vector<16x16xf32>
    %cst_13 = arith.constant dense<0.000000e+00> : vector<16xf32>
    %17 = vector.multi_reduction <add>, %16, %cst_13 [1] : vector<16x16xf32> to vector<16xf32>
    %18 = vector.shape_cast %17 : vector<16xf32> to vector<16x1xf32>
    %19 = tpu.reciprocal %18 {approx = true} : vector<16x1xf32> -> vector<16x1xf32>
    %20 = vector.broadcast %19 : vector<16x1xf32> to vector<16x16xf32>
    %21 = arith.mulf %16, %20 : vector<16x16xf32>
    %22 = arith.truncf %21 : vector<16x16xf32> to vector<16x16xbf16>
    %cst_14 = arith.constant dense<0.000000e+00> : vector<16x8xf32>
    %23 = tpu.matmul %22, %5, %cst_14 {dimension_numbers = #tpu.dot_dimension_numbers<[1], [0], [0], [1], [0, 0, 1, 1], [], []>} : vector<16x16xbf16>, vector<16x8xbf16>, vector<16x8xf32> -> vector<16x8xf32>
    %24 = arith.truncf %23 : vector<16x8xf32> to vector<16x8xbf16>
    %c0_15 = arith.constant 0 : index
    %c0_16 = arith.constant 0 : index
    %c0_17 = arith.constant 0 : index
    %c0_18 = arith.constant 0 : index
    %25 = vector.load %arg5[%c0_15, %c0_16, %c0_17, %c0_18] : memref<1x1x16x8xbf16, #tpu.memory_space<vmem>>, vector<1x1x16x8xbf16>
    %26 = vector.shape_cast %25 : vector<1x1x16x8xbf16> to vector<16x8xbf16>
    %27 = vector.shape_cast %24 : vector<16x8xbf16> to vector<1x1x16x8xbf16>
    tpu.vector_store %arg5[%c0_15, %c0_16, %c0_17, %c0_18], %27 {strides = array<i32>} : memref<1x1x16x8xbf16, #tpu.memory_space<vmem>>, vector<1x1x16x8xbf16>,
    return
  }
  func.func @transform_0(%arg0: i32, %arg1: i32) -> (i32, i32, i32, i32) {
    %c0_i32 = arith.constant 0 : i32
    %c0_i32_0 = arith.constant 0 : i32
    %c0_i32_1 = arith.constant 0 : i32
    return %arg0, %arg1, %c0_i32, %c0_i32_0 : i32, i32, i32, i32
  }
  func.func @transform_1(%arg0: i32, %arg1: i32) -> (i32, i32, i32, i32) {
    %c0_i32 = arith.constant 0 : i32
    %c0_i32_0 = arith.constant 0 : i32
    %c0_i32_1 = arith.constant 0 : i32
    return %arg0, %arg1, %c0_i32, %c0_i32_0 : i32, i32, i32, i32
  }
  func.func @transform_2(%arg0: i32, %arg1: i32) -> (i32, i32, i32, i32) {
    %c0_i32 = arith.constant 0 : i32
    %c0_i32_0 = arith.constant 0 : i32
    %c0_i32_1 = arith.constant 0 : i32
    return %arg0, %arg1, %c0_i32, %c0_i32_0 : i32, i32, i32, i32
  }
  func.func @transform_3(%arg0: i32, %arg1: i32) -> (i32, i32, i32, i32) {
    %c0_i32 = arith.constant 0 : i32
    %c0_i32_0 = arith.constant 0 : i32
    %c0_i32_1 = arith.constant 0 : i32
    return %arg0, %arg1, %c0_i32, %c0_i32_0 : i32, i32, i32, i32
  }
}

module attributes {stable_mosaic.version = 11 : i64} {
  func.func @_linear_residual_kernel(%arg0: i32, %arg1: i32, %arg2: i32, %arg3: memref<32x64xbf16, #tpu.memory_space<vmem>>, %arg4: memref<64x32xbf16, #tpu.memory_space<vmem>>, %arg5: memref<1x32xf32, #tpu.memory_space<vmem>>, %arg6: memref<32x32xbf16, #tpu.memory_space<vmem>>, %arg7: memref<32x32xbf16, #tpu.memory_space<vmem>>, %arg8: memref<32x32xf32, #tpu.memory_space<vmem>>) attributes {dimension_semantics = [#tpu.dimension_semantics<parallel>, #tpu.dimension_semantics<parallel>, #tpu.dimension_semantics<arbitrary>], iteration_bounds = array<i64: 1, 1, 1>, scalar_prefetch = 0 : i64, scratch_operands = 1 : i64, tpu.core_type = #tpu.core_type<tc>, window_params = [{transform_indices = @transform_0, window_bounds = array<i64: 32, 64>}, {transform_indices = @transform_1, window_bounds = array<i64: 64, 32>}, {transform_indices = @transform_2, window_bounds = array<i64: 1, 32>}, {transform_indices = @transform_3, window_bounds = array<i64: 32, 32>}, {transform_indices = @transform_4, window_bounds = array<i64: 32, 32>}]} {
    %c0_i32 = arith.constant 0 : i32
    %0 = arith.cmpi eq, %arg2, %c0_i32 : i32
    %1 = arith.extui %0 : i1 to i32
    %c0_i32_0 = arith.constant 0 : i32
    %2 = arith.cmpi ne, %1, %c0_i32_0 : i32
    scf.if %2 {
      %cst_10 = arith.constant 0.000000e+00 : f32
      %12 = vector.broadcast %cst_10 : f32 to vector<32x32xf32>
      %c0_11 = arith.constant 0 : index
      %c0_12 = arith.constant 0 : index
      %13 = vector.load %arg8[%c0_11, %c0_12] : memref<32x32xf32, #tpu.memory_space<vmem>>, vector<32x32xf32>
      tpu.vector_store %arg8[%c0_11, %c0_12], %12 {strides = array<i32>} : memref<32x32xf32, #tpu.memory_space<vmem>>, vector<32x32xf32>,
    } else {
    }
    %c0 = arith.constant 0 : index
    %c0_1 = arith.constant 0 : index
    %3 = vector.load %arg8[%c0, %c0_1] : memref<32x32xf32, #tpu.memory_space<vmem>>, vector<32x32xf32>
    %c0_2 = arith.constant 0 : index
    %c0_3 = arith.constant 0 : index
    %4 = vector.load %arg3[%c0_2, %c0_3] : memref<32x64xbf16, #tpu.memory_space<vmem>>, vector<32x64xbf16>
    %c0_4 = arith.constant 0 : index
    %c0_5 = arith.constant 0 : index
    %5 = vector.load %arg4[%c0_4, %c0_5] : memref<64x32xbf16, #tpu.memory_space<vmem>>, vector<64x32xbf16>
    %cst = arith.constant dense<0.000000e+00> : vector<32x32xf32>
    %6 = tpu.matmul %4, %5, %cst {dimension_numbers = #tpu.dot_dimension_numbers<[1], [0], [0], [1], [0, 0, 1, 1], [], []>} : vector<32x64xbf16>, vector<64x32xbf16>, vector<32x32xf32> -> vector<32x32xf32>
    %7 = arith.addf %3, %6 : vector<32x32xf32>
    %c0_6 = arith.constant 0 : index
    %c0_7 = arith.constant 0 : index
    %8 = vector.load %arg8[%c0_6, %c0_7] : memref<32x32xf32, #tpu.memory_space<vmem>>, vector<32x32xf32>
    tpu.vector_store %arg8[%c0_6, %c0_7], %7 {strides = array<i32>} : memref<32x32xf32, #tpu.memory_space<vmem>>, vector<32x32xf32>,
    %c0_i32_8 = arith.constant 0 : i32
    %9 = arith.cmpi eq, %arg2, %c0_i32_8 : i32
    %10 = arith.extui %9 : i1 to i32
    %c0_i32_9 = arith.constant 0 : i32
    %11 = arith.cmpi ne, %10, %c0_i32_9 : i32
    scf.if %11 {
      %c0_10 = arith.constant 0 : index
      %c0_11 = arith.constant 0 : index
      %12 = vector.load %arg8[%c0_10, %c0_11] : memref<32x32xf32, #tpu.memory_space<vmem>>, vector<32x32xf32>
      %c0_12 = arith.constant 0 : index
      %c0_13 = arith.constant 0 : index
      %13 = vector.load %arg5[%c0_12, %c0_13] : memref<1x32xf32, #tpu.memory_space<vmem>>, vector<1x32xf32>
      %14 = vector.broadcast %13 : vector<1x32xf32> to vector<32x32xf32>
      %15 = arith.addf %12, %14 : vector<32x32xf32>
      %c0_14 = arith.constant 0 : index
      %c0_15 = arith.constant 0 : index
      %16 = vector.load %arg6[%c0_14, %c0_15] : memref<32x32xbf16, #tpu.memory_space<vmem>>, vector<32x32xbf16>
      %17 = arith.extf %16 : vector<32x32xbf16> to vector<32x32xf32>
      %18 = arith.addf %15, %17 : vector<32x32xf32>
      %19 = arith.truncf %18 : vector<32x32xf32> to vector<32x32xbf16>
      %c0_16 = arith.constant 0 : index
      %c0_17 = arith.constant 0 : index
      %20 = vector.load %arg7[%c0_16, %c0_17] : memref<32x32xbf16, #tpu.memory_space<vmem>>, vector<32x32xbf16>
      tpu.vector_store %arg7[%c0_16, %c0_17], %19 {strides = array<i32>} : memref<32x32xbf16, #tpu.memory_space<vmem>>, vector<32x32xbf16>,
    } else {
    }
    return
  }
  func.func @transform_0(%arg0: i32, %arg1: i32, %arg2: i32) -> (i32, i32) {
    %c0_i32 = arith.constant 0 : i32
    return %arg0, %arg2 : i32, i32
  }
  func.func @transform_1(%arg0: i32, %arg1: i32, %arg2: i32) -> (i32, i32) {
    %c0_i32 = arith.constant 0 : i32
    return %arg2, %arg1 : i32, i32
  }
  func.func @transform_2(%arg0: i32, %arg1: i32, %arg2: i32) -> (i32, i32) {
    %c0_i32 = arith.constant 0 : i32
    %c0_i32_0 = arith.constant 0 : i32
    return %c0_i32, %arg1 : i32, i32
  }
  func.func @transform_3(%arg0: i32, %arg1: i32, %arg2: i32) -> (i32, i32) {
    %c0_i32 = arith.constant 0 : i32
    return %arg0, %arg1 : i32, i32
  }
  func.func @transform_4(%arg0: i32, %arg1: i32, %arg2: i32) -> (i32, i32) {
    %c0_i32 = arith.constant 0 : i32
    return %arg0, %arg1 : i32, i32
  }
}

module attributes {stable_mosaic.version = 11 : i64} {
  func.func @_ln_linear_kernel(%arg0: i32, %arg1: i32, %arg2: memref<32x32xbf16, #tpu.memory_space<vmem>>, %arg3: memref<1x32xf32, #tpu.memory_space<vmem>>, %arg4: memref<1x32xf32, #tpu.memory_space<vmem>>, %arg5: memref<32x64xbf16, #tpu.memory_space<vmem>>, %arg6: memref<1x64xf32, #tpu.memory_space<vmem>>, %arg7: memref<32x64xbf16, #tpu.memory_space<vmem>>, %arg8: memref<32x32xbf16, #tpu.memory_space<vmem>>) attributes {dimension_semantics = [#tpu.dimension_semantics<parallel>, #tpu.dimension_semantics<arbitrary>], iteration_bounds = array<i64: 1, 1>, scalar_prefetch = 0 : i64, scratch_operands = 1 : i64, tpu.core_type = #tpu.core_type<tc>, window_params = [{transform_indices = @transform_0, window_bounds = array<i64: 32, 32>}, {pipeline_mode = #tpu.pipeline_mode<synchronous>, transform_indices = @transform_1, window_bounds = array<i64: 1, 32>}, {pipeline_mode = #tpu.pipeline_mode<synchronous>, transform_indices = @transform_2, window_bounds = array<i64: 1, 32>}, {transform_indices = @transform_3, window_bounds = array<i64: 32, 64>}, {transform_indices = @transform_4, window_bounds = array<i64: 1, 64>}, {transform_indices = @transform_5, window_bounds = array<i64: 32, 64>}]} {
    %c0_i32 = arith.constant 0 : i32
    %0 = arith.cmpi eq, %arg1, %c0_i32 : i32
    %1 = arith.extui %0 : i1 to i32
    %c0_i32_0 = arith.constant 0 : i32
    %2 = arith.cmpi ne, %1, %c0_i32_0 : i32
    scf.if %2 {
      %c0_24 = arith.constant 0 : index
      %c0_25 = arith.constant 0 : index
      %52 = vector.load %arg2[%c0_24, %c0_25] : memref<32x32xbf16, #tpu.memory_space<vmem>>, vector<32x32xbf16>
      %53 = arith.extf %52 : vector<32x32xbf16> to vector<32x32xf32>
      %cst_26 = arith.constant dense<0.000000e+00> : vector<32xf32>
      %54 = vector.multi_reduction <add>, %53, %cst_26 [1] : vector<32x32xf32> to vector<32xf32>
      %55 = vector.shape_cast %54 : vector<32xf32> to vector<32x1xf32>
      %cst_27 = arith.constant 3.200000e+01 : f32
      %56 = vector.broadcast %cst_27 : f32 to vector<32x1xf32>
      %57 = arith.divf %55, %56 : vector<32x1xf32>
      %58 = vector.broadcast %57 : vector<32x1xf32> to vector<32x32xf32>
      %59 = arith.subf %53, %58 : vector<32x32xf32>
      %60 = arith.mulf %59, %59 : vector<32x32xf32>
      %cst_28 = arith.constant dense<0.000000e+00> : vector<32xf32>
      %61 = vector.multi_reduction <add>, %60, %cst_28 [1] : vector<32x32xf32> to vector<32xf32>
      %62 = vector.shape_cast %61 : vector<32xf32> to vector<32x1xf32>
      %cst_29 = arith.constant 3.200000e+01 : f32
      %63 = vector.broadcast %cst_29 : f32 to vector<32x1xf32>
      %64 = arith.divf %62, %63 : vector<32x1xf32>
      %65 = vector.broadcast %57 : vector<32x1xf32> to vector<32x32xf32>
      %66 = arith.subf %53, %65 : vector<32x32xf32>
      %cst_30 = arith.constant 9.99999996E-13 : f32
      %67 = vector.broadcast %cst_30 : f32 to vector<32x1xf32>
      %68 = arith.addf %64, %67 : vector<32x1xf32>
      %69 = math.rsqrt %68 : vector<32x1xf32>
      %70 = vector.broadcast %69 : vector<32x1xf32> to vector<32x32xf32>
      %71 = arith.mulf %66, %70 : vector<32x32xf32>
      %c0_31 = arith.constant 0 : index
      %c0_32 = arith.constant 0 : index
      %72 = vector.load %arg3[%c0_31, %c0_32] : memref<1x32xf32, #tpu.memory_space<vmem>>, vector<1x32xf32>
      %73 = vector.broadcast %72 : vector<1x32xf32> to vector<32x32xf32>
      %74 = arith.mulf %71, %73 : vector<32x32xf32>
      %c0_33 = arith.constant 0 : index
      %c0_34 = arith.constant 0 : index
      %75 = vector.load %arg4[%c0_33, %c0_34] : memref<1x32xf32, #tpu.memory_space<vmem>>, vector<1x32xf32>
      %76 = vector.broadcast %75 : vector<1x32xf32> to vector<32x32xf32>
      %77 = arith.addf %74, %76 : vector<32x32xf32>
      %78 = arith.truncf %77 : vector<32x32xf32> to vector<32x32xbf16>
      %c0_35 = arith.constant 0 : index
      %c0_36 = arith.constant 0 : index
      %79 = vector.load %arg8[%c0_35, %c0_36] : memref<32x32xbf16, #tpu.memory_space<vmem>>, vector<32x32xbf16>
      tpu.vector_store %arg8[%c0_35, %c0_36], %78 {strides = array<i32>} : memref<32x32xbf16, #tpu.memory_space<vmem>>, vector<32x32xbf16>,
    } else {
    }
    %c0 = arith.constant 0 : index
    %c0_1 = arith.constant 0 : index
    %3 = vector.load %arg8[%c0, %c0_1] : memref<32x32xbf16, #tpu.memory_space<vmem>>, vector<32x32xbf16>
    %c0_2 = arith.constant 0 : index
    %c0_3 = arith.constant 0 : index
    %4 = vector.load %arg5[%c0_2, %c0_3] : memref<32x64xbf16, #tpu.memory_space<vmem>>, vector<32x64xbf16>
    %cst = arith.constant dense<0.000000e+00> : vector<32x64xf32>
    %5 = tpu.matmul %3, %4, %cst {dimension_numbers = #tpu.dot_dimension_numbers<[1], [0], [0], [1], [0, 0, 1, 1], [], []>} : vector<32x32xbf16>, vector<32x64xbf16>, vector<32x64xf32> -> vector<32x64xf32>
    %c0_4 = arith.constant 0 : index
    %c0_5 = arith.constant 0 : index
    %6 = vector.load %arg6[%c0_4, %c0_5] : memref<1x64xf32, #tpu.memory_space<vmem>>, vector<1x64xf32>
    %7 = vector.broadcast %6 : vector<1x64xf32> to vector<32x64xf32>
    %8 = arith.addf %5, %7 : vector<32x64xf32>
    %cst_6 = arith.constant 5.000000e-01 : f32
    %9 = vector.broadcast %cst_6 : f32 to vector<32x64xf32>
    %10 = arith.mulf %9, %8 : vector<32x64xf32>
    %cst_7 = arith.constant 0.707106769 : f32
    %11 = vector.broadcast %cst_7 : f32 to vector<32x64xf32>
    %12 = arith.mulf %8, %11 : vector<32x64xf32>
    %cst_8 = arith.constant 0.000000e+00 : f32
    %13 = vector.broadcast %cst_8 : f32 to vector<32x64xf32>
    %14 = arith.cmpf oge, %12, %13 : vector<32x64xf32>
    %cst_9 = arith.constant 1.000000e+00 : f32
    %cst_10 = arith.constant -1.000000e+00 : f32
    %15 = vector.broadcast %cst_9 : f32 to vector<32x64xf32>
    %16 = vector.broadcast %cst_10 : f32 to vector<32x64xf32>
    %17 = arith.select %14, %15, %16 : vector<32x64xi1>, vector<32x64xf32>
    %18 = math.absf %12 : vector<32x64xf32>
    %cst_11 = arith.constant 0.327591091 : f32
    %19 = vector.broadcast %cst_11 : f32 to vector<32x64xf32>
    %20 = arith.mulf %19, %18 : vector<32x64xf32>
    %cst_12 = arith.constant 1.000000e+00 : f32
    %21 = vector.broadcast %cst_12 : f32 to vector<32x64xf32>
    %22 = arith.addf %21, %20 : vector<32x64xf32>
    %cst_13 = arith.constant 1.000000e+00 : f32
    %23 = vector.broadcast %cst_13 : f32 to vector<32x64xf32>
    %24 = arith.divf %23, %22 : vector<32x64xf32>
    %cst_14 = arith.constant 1.06140542 : f32
    %25 = vector.broadcast %cst_14 : f32 to vector<32x64xf32>
    %26 = arith.mulf %25, %24 : vector<32x64xf32>
    %cst_15 = arith.constant -1.45315206 : f32
    %27 = vector.broadcast %cst_15 : f32 to vector<32x64xf32>
    %28 = arith.addf %26, %27 : vector<32x64xf32>
    %29 = arith.mulf %28, %24 : vector<32x64xf32>
    %cst_16 = arith.constant 1.42141378 : f32
    %30 = vector.broadcast %cst_16 : f32 to vector<32x64xf32>
    %31 = arith.addf %29, %30 : vector<32x64xf32>
    %32 = arith.mulf %31, %24 : vector<32x64xf32>
    %cst_17 = arith.constant -0.284496725 : f32
    %33 = vector.broadcast %cst_17 : f32 to vector<32x64xf32>
    %34 = arith.addf %32, %33 : vector<32x64xf32>
    %35 = arith.mulf %34, %24 : vector<32x64xf32>
    %cst_18 = arith.constant 0.254829586 : f32
    %36 = vector.broadcast %cst_18 : f32 to vector<32x64xf32>
    %37 = arith.addf %35, %36 : vector<32x64xf32>
    %38 = arith.mulf %37, %24 : vector<32x64xf32>
    %cst_19 = arith.constant 0.000000e+00 : f32
    %39 = vector.broadcast %cst_19 : f32 to vector<32x64xf32>
    %40 = arith.subf %39, %18 : vector<32x64xf32>
    %41 = arith.mulf %40, %18 : vector<32x64xf32>
    %42 = math.exp %41 : vector<32x64xf32>
    %43 = arith.mulf %38, %42 : vector<32x64xf32>
    %cst_20 = arith.constant 1.000000e+00 : f32
    %44 = vector.broadcast %cst_20 : f32 to vector<32x64xf32>
    %45 = arith.subf %44, %43 : vector<32x64xf32>
    %46 = arith.mulf %17, %45 : vector<32x64xf32>
    %cst_21 = arith.constant 1.000000e+00 : f32
    %47 = vector.broadcast %cst_21 : f32 to vector<32x64xf32>
    %48 = arith.addf %47, %46 : vector<32x64xf32>
    %49 = arith.mulf %10, %48 : vector<32x64xf32>
    %50 = arith.truncf %49 : vector<32x64xf32> to vector<32x64xbf16>
    %c0_22 = arith.constant 0 : index
    %c0_23 = arith.constant 0 : index
    %51 = vector.load %arg7[%c0_22, %c0_23] : memref<32x64xbf16, #tpu.memory_space<vmem>>, vector<32x64xbf16>
    tpu.vector_store %arg7[%c0_22, %c0_23], %50 {strides = array<i32>} : memref<32x64xbf16, #tpu.memory_space<vmem>>, vector<32x64xbf16>,
    return
  }
  func.func @transform_0(%arg0: i32, %arg1: i32) -> (i32, i32) {
    %c0_i32 = arith.constant 0 : i32
    %c0_i32_0 = arith.constant 0 : i32
    return %arg0, %c0_i32 : i32, i32
  }
  func.func @transform_1(%arg0: i32, %arg1: i32) -> (i32, i32) {
    %c0_i32 = arith.constant 0 : i32
    %c0_i32_0 = arith.constant 0 : i32
    %c0_i32_1 = arith.constant 0 : i32
    return %c0_i32, %c0_i32_0 : i32, i32
  }
  func.func @transform_2(%arg0: i32, %arg1: i32) -> (i32, i32) {
    %c0_i32 = arith.constant 0 : i32
    %c0_i32_0 = arith.constant 0 : i32
    %c0_i32_1 = arith.constant 0 : i32
    return %c0_i32, %c0_i32_0 : i32, i32
  }
  func.func @transform_3(%arg0: i32, %arg1: i32) -> (i32, i32) {
    %c0_i32 = arith.constant 0 : i32
    %c0_i32_0 = arith.constant 0 : i32
    return %c0_i32, %arg1 : i32, i32
  }
  func.func @transform_4(%arg0: i32, %arg1: i32) -> (i32, i32) {
    %c0_i32 = arith.constant 0 : i32
    %c0_i32_0 = arith.constant 0 : i32
    return %c0_i32, %arg1 : i32, i32
  }
  func.func @transform_5(%arg0: i32, %arg1: i32) -> (i32, i32) {
    %c0_i32 = arith.constant 0 : i32
    return %arg0, %arg1 : i32, i32
  }
}

module attributes {stable_mosaic.version = 11 : i64} {
  func.func @_linear_residual_kernel(%arg0: i32, %arg1: i32, %arg2: i32, %arg3: memref<32x32xbf16, #tpu.memory_space<vmem>>, %arg4: memref<32x32xbf16, #tpu.memory_space<vmem>>, %arg5: memref<1x32xf32, #tpu.memory_space<vmem>>, %arg6: memref<32x32xbf16, #tpu.memory_space<vmem>>, %arg7: memref<32x32xbf16, #tpu.memory_space<vmem>>, %arg8: memref<32x32xf32, #tpu.memory_space<vmem>>) attributes {dimension_semantics = [#tpu.dimension_semantics<parallel>, #tpu.dimension_semantics<parallel>, #tpu.dimension_semantics<arbitrary>], iteration_bounds = array<i64: 1, 1, 1>, scalar_prefetch = 0 : i64, scratch_operands = 1 : i64, tpu.core_type = #tpu.core_type<tc>, window_params = [{transform_indices = @transform_0, window_bounds = array<i64: 32, 32>}, {transform_indices = @transform_1, window_bounds = array<i64: 32, 32>}, {transform_indices = @transform_2, window_bounds = array<i64: 1, 32>}, {transform_indices = @transform_3, window_bounds = array<i64: 32, 32>}, {transform_indices = @transform_4, window_bounds = array<i64: 32, 32>}]} {
    %c0_i32 = arith.constant 0 : i32
    %0 = arith.cmpi eq, %arg2, %c0_i32 : i32
    %1 = arith.extui %0 : i1 to i32
    %c0_i32_0 = arith.constant 0 : i32
    %2 = arith.cmpi ne, %1, %c0_i32_0 : i32
    scf.if %2 {
      %cst_10 = arith.constant 0.000000e+00 : f32
      %12 = vector.broadcast %cst_10 : f32 to vector<32x32xf32>
      %c0_11 = arith.constant 0 : index
      %c0_12 = arith.constant 0 : index
      %13 = vector.load %arg8[%c0_11, %c0_12] : memref<32x32xf32, #tpu.memory_space<vmem>>, vector<32x32xf32>
      tpu.vector_store %arg8[%c0_11, %c0_12], %12 {strides = array<i32>} : memref<32x32xf32, #tpu.memory_space<vmem>>, vector<32x32xf32>,
    } else {
    }
    %c0 = arith.constant 0 : index
    %c0_1 = arith.constant 0 : index
    %3 = vector.load %arg8[%c0, %c0_1] : memref<32x32xf32, #tpu.memory_space<vmem>>, vector<32x32xf32>
    %c0_2 = arith.constant 0 : index
    %c0_3 = arith.constant 0 : index
    %4 = vector.load %arg3[%c0_2, %c0_3] : memref<32x32xbf16, #tpu.memory_space<vmem>>, vector<32x32xbf16>
    %c0_4 = arith.constant 0 : index
    %c0_5 = arith.constant 0 : index
    %5 = vector.load %arg4[%c0_4, %c0_5] : memref<32x32xbf16, #tpu.memory_space<vmem>>, vector<32x32xbf16>
    %cst = arith.constant dense<0.000000e+00> : vector<32x32xf32>
    %6 = tpu.matmul %4, %5, %cst {dimension_numbers = #tpu.dot_dimension_numbers<[1], [0], [0], [1], [0, 0, 1, 1], [], []>} : vector<32x32xbf16>, vector<32x32xbf16>, vector<32x32xf32> -> vector<32x32xf32>
    %7 = arith.addf %3, %6 : vector<32x32xf32>
    %c0_6 = arith.constant 0 : index
    %c0_7 = arith.constant 0 : index
    %8 = vector.load %arg8[%c0_6, %c0_7] : memref<32x32xf32, #tpu.memory_space<vmem>>, vector<32x32xf32>
    tpu.vector_store %arg8[%c0_6, %c0_7], %7 {strides = array<i32>} : memref<32x32xf32, #tpu.memory_space<vmem>>, vector<32x32xf32>,
    %c0_i32_8 = arith.constant 0 : i32
    %9 = arith.cmpi eq, %arg2, %c0_i32_8 : i32
    %10 = arith.extui %9 : i1 to i32
    %c0_i32_9 = arith.constant 0 : i32
    %11 = arith.cmpi ne, %10, %c0_i32_9 : i32
    scf.if %11 {
      %c0_10 = arith.constant 0 : index
      %c0_11 = arith.constant 0 : index
      %12 = vector.load %arg8[%c0_10, %c0_11] : memref<32x32xf32, #tpu.memory_space<vmem>>, vector<32x32xf32>
      %c0_12 = arith.constant 0 : index
      %c0_13 = arith.constant 0 : index
      %13 = vector.load %arg5[%c0_12, %c0_13] : memref<1x32xf32, #tpu.memory_space<vmem>>, vector<1x32xf32>
      %14 = vector.broadcast %13 : vector<1x32xf32> to vector<32x32xf32>
      %15 = arith.addf %12, %14 : vector<32x32xf32>
      %c0_14 = arith.constant 0 : index
      %c0_15 = arith.constant 0 : index
      %16 = vector.load %arg6[%c0_14, %c0_15] : memref<32x32xbf16, #tpu.memory_space<vmem>>, vector<32x32xbf16>
      %17 = arith.extf %16 : vector<32x32xbf16> to vector<32x32xf32>
      %18 = arith.addf %15, %17 : vector<32x32xf32>
      %19 = arith.truncf %18 : vector<32x32xf32> to vector<32x32xbf16>
      %c0_16 = arith.constant 0 : index
      %c0_17 = arith.constant 0 : index
      %20 = vector.load %arg7[%c0_16, %c0_17] : memref<32x32xbf16, #tpu.memory_space<vmem>>, vector<32x32xbf16>
      tpu.vector_store %arg7[%c0_16, %c0_17], %19 {strides = array<i32>} : memref<32x32xbf16, #tpu.memory_space<vmem>>, vector<32x32xbf16>,
    } else {
    }
    return
  }
  func.func @transform_0(%arg0: i32, %arg1: i32, %arg2: i32) -> (i32, i32) {
    %c0_i32 = arith.constant 0 : i32
    return %arg0, %arg2 : i32, i32
  }
  func.func @transform_1(%arg0: i32, %arg1: i32, %arg2: i32) -> (i32, i32) {
    %c0_i32 = arith.constant 0 : i32
    return %arg2, %arg1 : i32, i32
  }
  func.func @transform_2(%arg0: i32, %arg1: i32, %arg2: i32) -> (i32, i32) {
    %c0_i32 = arith.constant 0 : i32
    %c0_i32_0 = arith.constant 0 : i32
    return %c0_i32, %arg1 : i32, i32
  }
  func.func @transform_3(%arg0: i32, %arg1: i32, %arg2: i32) -> (i32, i32) {
    %c0_i32 = arith.constant 0 : i32
    return %arg0, %arg1 : i32, i32
  }
  func.func @transform_4(%arg0: i32, %arg1: i32, %arg2: i32) -> (i32, i32) {
    %c0_i32 = arith.constant 0 : i32
    return %arg0, %arg1 : i32, i32
  }
}

module attributes {stable_mosaic.version = 11 : i64} {
  func.func @_layernorm_kernel(%arg0: i32, %arg1: memref<32x32xbf16, #tpu.memory_space<vmem>>, %arg2: memref<1x32xf32, #tpu.memory_space<vmem>>, %arg3: memref<1x32xf32, #tpu.memory_space<vmem>>, %arg4: memref<32x32xf32, #tpu.memory_space<vmem>>) attributes {dimension_semantics = [#tpu.dimension_semantics<parallel>], iteration_bounds = array<i64: 1>, scalar_prefetch = 0 : i64, scratch_operands = 0 : i64, tpu.core_type = #tpu.core_type<tc>, window_params = [{transform_indices = @transform_0, window_bounds = array<i64: 32, 32>}, {pipeline_mode = #tpu.pipeline_mode<synchronous>, transform_indices = @transform_1, window_bounds = array<i64: 1, 32>}, {pipeline_mode = #tpu.pipeline_mode<synchronous>, transform_indices = @transform_2, window_bounds = array<i64: 1, 32>}, {transform_indices = @transform_3, window_bounds = array<i64: 32, 32>}]} {
    %c0 = arith.constant 0 : index
    %c0_0 = arith.constant 0 : index
    %0 = vector.load %arg1[%c0, %c0_0] : memref<32x32xbf16, #tpu.memory_space<vmem>>, vector<32x32xbf16>
    %1 = arith.extf %0 : vector<32x32xbf16> to vector<32x32xf32>
    %cst = arith.constant dense<0.000000e+00> : vector<32xf32>
    %2 = vector.multi_reduction <add>, %1, %cst [1] : vector<32x32xf32> to vector<32xf32>
    %3 = vector.shape_cast %2 : vector<32xf32> to vector<32x1xf32>
    %cst_1 = arith.constant 3.200000e+01 : f32
    %4 = vector.broadcast %cst_1 : f32 to vector<32x1xf32>
    %5 = arith.divf %3, %4 : vector<32x1xf32>
    %6 = vector.broadcast %5 : vector<32x1xf32> to vector<32x32xf32>
    %7 = arith.subf %1, %6 : vector<32x32xf32>
    %8 = arith.mulf %7, %7 : vector<32x32xf32>
    %cst_2 = arith.constant dense<0.000000e+00> : vector<32xf32>
    %9 = vector.multi_reduction <add>, %8, %cst_2 [1] : vector<32x32xf32> to vector<32xf32>
    %10 = vector.shape_cast %9 : vector<32xf32> to vector<32x1xf32>
    %cst_3 = arith.constant 3.200000e+01 : f32
    %11 = vector.broadcast %cst_3 : f32 to vector<32x1xf32>
    %12 = arith.divf %10, %11 : vector<32x1xf32>
    %13 = vector.broadcast %5 : vector<32x1xf32> to vector<32x32xf32>
    %14 = arith.subf %1, %13 : vector<32x32xf32>
    %cst_4 = arith.constant 9.99999996E-13 : f32
    %15 = vector.broadcast %cst_4 : f32 to vector<32x1xf32>
    %16 = arith.addf %12, %15 : vector<32x1xf32>
    %17 = math.rsqrt %16 : vector<32x1xf32>
    %18 = vector.broadcast %17 : vector<32x1xf32> to vector<32x32xf32>
    %19 = arith.mulf %14, %18 : vector<32x32xf32>
    %c0_5 = arith.constant 0 : index
    %c0_6 = arith.constant 0 : index
    %20 = vector.load %arg2[%c0_5, %c0_6] : memref<1x32xf32, #tpu.memory_space<vmem>>, vector<1x32xf32>
    %21 = vector.broadcast %20 : vector<1x32xf32> to vector<32x32xf32>
    %22 = arith.mulf %19, %21 : vector<32x32xf32>
    %c0_7 = arith.constant 0 : index
    %c0_8 = arith.constant 0 : index
    %23 = vector.load %arg3[%c0_7, %c0_8] : memref<1x32xf32, #tpu.memory_space<vmem>>, vector<1x32xf32>
    %24 = vector.broadcast %23 : vector<1x32xf32> to vector<32x32xf32>
    %25 = arith.addf %22, %24 : vector<32x32xf32>
    %c0_9 = arith.constant 0 : index
    %c0_10 = arith.constant 0 : index
    %26 = vector.load %arg4[%c0_9, %c0_10] : memref<32x32xf32, #tpu.memory_space<vmem>>, vector<32x32xf32>
    tpu.vector_store %arg4[%c0_9, %c0_10], %25 {strides = array<i32>} : memref<32x32xf32, #tpu.memory_space<vmem>>, vector<32x32xf32>,
    return
  }
  func.func @transform_0(%arg0: i32) -> (i32, i32) {
    %c0_i32 = arith.constant 0 : i32
    %c0_i32_0 = arith.constant 0 : i32
    return %arg0, %c0_i32 : i32, i32
  }
  func.func @transform_1(%arg0: i32) -> (i32, i32) {
    %c0_i32 = arith.constant 0 : i32
    %c0_i32_0 = arith.constant 0 : i32
    %c0_i32_1 = arith.constant 0 : i32
    return %c0_i32, %c0_i32_0 : i32, i32
  }
  func.func @transform_2(%arg0: i32) -> (i32, i32) {
    %c0_i32 = arith.constant 0 : i32
    %c0_i32_0 = arith.constant 0 : i32
    %c0_i32_1 = arith.constant 0 : i32
    return %c0_i32, %c0_i32_0 : i32, i32
  }
  func.func @transform_3(%arg0: i32) -> (i32, i32) {
    %c0_i32 = arith.constant 0 : i32
    %c0_i32_0 = arith.constant 0 : i32
    return %arg0, %c0_i32 : i32, i32
  }
}

</mosaic_0001>

<llo_original>
// kernel: _lambda_.12
$region0: #{_lambda_.12}
  #allocation0 [shape = 'u32[]', space=smem, size = 0x4, offset = 0x4, fixed_abs, tag = 'smem constant byte address 0x4 - core index']
  #allocation1 [shape = 'u32[144,128]{1,0:T(1,128)}', space=vmem, size = 0x12000, scoped, tag = 'internal scratch']
  #allocation2 [shape = 'f32[8,32]{1,0:T(8,128)}', space=vmem, size = 0x1000, scoped, tag = 'scratch operand']
  %s0 = inlined_call_operand.vmem [shape: bf16[8,192], index: 0, kind: input, shape index: {}]
  %s1 = inlined_call_operand.vmem [shape: bf16[192,32], index: 1, kind: input, shape index: {}]
  %s2 = inlined_call_operand.vmem [shape: f32[1,32], index: 2, kind: input, shape index: {}]
  %s3 = inlined_call_operand.vmem [shape: bf16[8,32], index: 3, kind: output, shape index: {}]
  %s4 = sld [smem:[#allocation0]]
  $region30: #{_lambda_.12} parent=0
    _
  %s6 = ssub.s32 1, %s4
  %s7 = scalar_select 0, %s6, %s4
  // Predicated region
  $region2: #{_lambda_.12} parent=0 // pred_check
    _
  $region3: #{_lambda_.12} parent=0 // pred_check_branch
    %9 = sbr.rel (0) target = $region5
  $region4: #{_lambda_.12} parent=0 // pred_region
    _
  $region5: #{_lambda_.12} parent=0 // pred_fallthru
    _
  // Predicated region
  $region6: #{_lambda_.12} parent=0 // pred_check
    _
  $region7: #{_lambda_.12} parent=0 // pred_check_branch
    %11 = sbr.rel (0) target = $region9
  $region8: #{_lambda_.12} parent=0 // pred_region
    _
  $region9: #{_lambda_.12} parent=0 // pred_fallthru
    _
  // Predicated region
  $region10: #{_lambda_.12} parent=0 // pred_check
    _
  $region11: #{_lambda_.12} parent=0 // pred_check_branch
    %13 = sbr.rel (0) target = $region13
  $region12: #{_lambda_.12} parent=0 // pred_region
    _
  $region13: #{_lambda_.12} parent=0 // pred_fallthru
    _
  %p15 = scmp.eq.s32.totalorder 0, 0
  // Predicated region
  $region14: #{_lambda_.12} parent=0 // pred_check
    %p16 = pneg %p15
  $region15: #{_lambda_.12} parent=0 // pred_check_branch
    %18 = sbr.rel (%p16) target = $region17
  $region16: #{_lambda_.12} parent=0 // pred_region
    %vm19 = vcmask 261120
    %20 = vst.msk [vmem:[#allocation2] sm:$0xff] %vm19, 0.0
  $region17: #{_lambda_.12} parent=0 // pred_fallthru
    _
  %v21 = vld [vmem:[#allocation2] sm:$0xff]
  %v22 = vld [vmem:[%s0] sm:$0xff]
  %v23 = vld [vmem:[%s1] sm:$0xf]
  %v24 = vld [vmem:[%s1 + $0x4] sm:$0xf]
  %v25 = vld [vmem:[%s1 + $0x8] sm:$0xf]
  %v26 = vld [vmem:[%s1 + $0xc] sm:$0xf]
  %v27 = vld [vmem:[%s1 + $0x10] sm:$0xf]
  %v28 = vld [vmem:[%s1 + $0x14] sm:$0xf]
  %v29 = vld [vmem:[%s1 + $0x18] sm:$0xf]
  %v30 = vld [vmem:[%s1 + $0x1c] sm:$0xf]
  %v31 = vld [vmem:[%s1 + $0x20] sm:$0xf]
  %v32 = vld [vmem:[%s1 + $0x24] sm:$0xf]
  %v33 = vld [vmem:[%s1 + $0x28] sm:$0xf]
  %v34 = vld [vmem:[%s1 + $0x2c] sm:$0xf]
  %v35 = vld [vmem:[%s1 + $0x30] sm:$0xf]
  %v36 = vld [vmem:[%s1 + $0x34] sm:$0xf]
  %v37 = vld [vmem:[%s1 + $0x38] sm:$0xf]
  %v38 = vld [vmem:[%s1 + $0x3c] sm:$0xf]
  %v39 = vld [vmem:[%s1 + $0x40] sm:$0xf]
  %v40 = vld [vmem:[%s1 + $0x44] sm:$0xf]
  %v41 = vld [vmem:[%s1 + $0x48] sm:$0xf]
  %v42 = vld [vmem:[%s1 + $0x4c] sm:$0xf]
  %v43 = vld [vmem:[%s1 + $0x50] sm:$0xf]
  %v44 = vld [vmem:[%s1 + $0x54] sm:$0xf]
  %v45 = vld [vmem:[%s1 + $0x58] sm:$0xf]
  %v46 = vld [vmem:[%s1 + $0x5c] sm:$0xf]
  %v48 = vunpack.c.l.b16 %v22
  %v49 = vunpack.c.h.b16 %v22
  %v50 = vpack.c.b16 %v48, %v48
  %v51 = vpack.c.b16 %v49, %v49
  %v77 = vunpack.c.l.b16 %v23
  %v78 = vunpack.c.l.b16 %v24
  %v79 = vunpack.c.l.b16 %v25
  %v80 = vunpack.c.l.b16 %v26
  %v81 = vunpack.c.l.b16 %v27
  %v82 = vunpack.c.l.b16 %v28
  %v83 = vunpack.c.l.b16 %v29
  %v84 = vunpack.c.l.b16 %v30
  %v85 = vunpack.c.l.b16 %v31
  %v86 = vunpack.c.l.b16 %v32
  %v87 = vunpack.c.l.b16 %v33
  %v88 = vunpack.c.l.b16 %v34
  %v89 = vunpack.c.l.b16 %v35
  %v90 = vunpack.c.l.b16 %v36
  %v91 = vunpack.c.l.b16 %v37
  %v92 = vunpack.c.l.b16 %v38
  %v93 = vunpack.c.l.b16 %v39
  %v94 = vunpack.c.l.b16 %v40
  %v95 = vunpack.c.l.b16 %v41
  %v96 = vunpack.c.l.b16 %v42
  %v97 = vunpack.c.l.b16 %v43
  %v98 = vunpack.c.l.b16 %v44
  %v99 = vunpack.c.l.b16 %v45
  %v100 = vunpack.c.l.b16 %v46
  %v101 = vpack.c.b16 %v78, %v77
  %v102 = vpack.c.b16 %v80, %v79
  %v103 = vpack.c.b16 %v82, %v81
  %v104 = vpack.c.b16 %v84, %v83
  %v105 = vpack.c.b16 %v86, %v85
  %v106 = vpack.c.b16 %v88, %v87
  %v107 = vpack.c.b16 %v90, %v89
  %v108 = vpack.c.b16 %v92, %v91
  %v109 = vpack.c.b16 %v94, %v93
  %v110 = vpack.c.b16 %v96, %v95
  %v111 = vpack.c.b16 %v98, %v97
  %v112 = vpack.c.b16 %v100, %v99
  %vm125 = vcmask 523264
  %v127 = vsel %vm125, %v51, 0
  %129 = vmatprep.subr.bf16.mxu0 0
  %130 = vmatpush1.bf16.msra.mxu0 %v101
  %131 = vmatprep.subr.bf16.mxu0 0
  %132 = vmatpush1.bf16.msra.mxu0 %v102
  %133 = vmatprep.subr.bf16.mxu0 0
  %134 = vmatpush1.bf16.msra.mxu0 %v103
  %135 = vmatprep.subr.bf16.mxu0 0
  %136 = vmatpush1.bf16.msra.mxu0 %v104
  %137 = vmatprep.subr.bf16.mxu0 0
  %138 = vmatpush1.bf16.msra.mxu0 %v105
  %139 = vmatprep.subr.bf16.mxu0 0
  %140 = vmatpush1.bf16.msra.mxu0 %v106
  %141 = vmatprep.subr.bf16.mxu0 0
  %142 = vmatpush1.bf16.msra.mxu0 %v107
  %143 = vmatprep.subr.bf16.mxu0 0
  %144 = vmatpush1.bf16.msra.mxu0 %v108
  %145 = vmatprep.subr.bf16.mxu0 0
  %146 = vmatpush1.bf16.msra.mxu0 %v109
  %147 = vmatprep.subr.bf16.mxu0 0
  %148 = vmatpush1.bf16.msra.mxu0 %v110
  %149 = vmatprep.subr.bf16.mxu0 0
  %150 = vmatpush1.bf16.msra.mxu0 %v111
  %151 = vmatprep.subr.bf16.mxu0 0
  %152 = vmatpush1.bf16.msra.mxu0 %v112
  %153 = vmatprep.subr.bf16.mxu0 0
  %154 = vmatpush1.bf16.msra.mxu0 0
  %155 = vmatprep.subr.bf16.mxu0 0
  %156 = vmatpush1.bf16.msra.mxu0 0
  %157 = vmatprep.subr.bf16.mxu0 0
  %158 = vmatpush1.bf16.msra.mxu0 0
  %159 = vmatprep.subr.bf16.mxu0 0
  %160 = vmatpush1.bf16.msra.mxu0 0
  %161 = vmatprep.mubr.bf16.mxu0 %v127
  %162 = vmatmul.mubr.bf16.gmra.mrb[0].mxu0 %v50
  %v163 = vpop.f32.mrb[0].mxu0
  %v164 = vadd.f32 0.0, %v163
  %v165 = vpop.f32.mrb[0].mxu0
  %v166 = vpop.f32.mrb[0].mxu0
  %v167 = vpop.f32.mrb[0].mxu0
  %168 = vdwg.mxu0
  %v169 = vadd.f32 %v21, %v164
  %vm170 = vcmask 261120
  %171 = vst.msk [vmem:[#allocation2] sm:$0xff] %vm170, %v169
  // Predicated region
  $region18: #{_lambda_.12} parent=0 // pred_check
    %p172 = pneg %p15
  $region19: #{_lambda_.12} parent=0 // pred_check_branch
    %174 = sbr.rel (%p172) target = $region21
  $region20: #{_lambda_.12} parent=0 // pred_region
    %v175 = vld [vmem:[#allocation2] sm:$0xff]
    %v176 = vld [vmem:[%s2] sm:$0x1]
    %v178 = vlaneseq
    %v179 = vshrl.u32 %v178, 7
    %v180 = vsub.s32 0, %v179
    %v181 = vrot.slane %v176, %v180
    %v183 = vadd.f32 %v175, %v181
    %v184 = vpack.c.bf16 %v183, %v183
    %vm185 = vcmask 257024
    %186 = vst.msk [vmem:[%s3] sm:$0xf] %vm185, %v184
  $region21: #{_lambda_.12} parent=0 // pred_fallthru
    _
  // Predicated region
  $region22: #{_lambda_.12} parent=0 // pred_check
    _
  $region23: #{_lambda_.12} parent=0 // pred_check_branch
    %188 = sbr.rel (0) target = $region25
  $region24: #{_lambda_.12} parent=0 // pred_region
    _
  $region25: #{_lambda_.12} parent=0 // pred_fallthru
    _
  // Predicated region
  $region26: #{_lambda_.12} parent=0 // pred_check
    _
  $region27: #{_lambda_.12} parent=0 // pred_check_branch
    %190 = sbr.rel (0) target = $region29
  $region28: #{_lambda_.12} parent=0 // pred_region
    _
  $region29: #{_lambda_.12} parent=0 // pred_fallthru
    _

// kernel: _lambda_.13
$region0: #{_lambda_.13}
  #allocation0 [shape = 'u32[]', space=smem, size = 0x4, offset = 0x4, fixed_abs, tag = 'smem constant byte address 0x4 - core index']
  #allocation1 [shape = 'u32[144,128]{1,0:T(1,128)}', space=vmem, size = 0x12000, scoped, tag = 'internal scratch']
  #allocation2 [shape = 'bf16[32,32]{1,0:T(16,128)(2,1)}', space=vmem, size = 0x2000, scoped, tag = 'scratch operand']
  %s0 = inlined_call_operand.vmem [shape: bf16[32,32], index: 0, kind: input, shape index: {}]
  %s1 = inlined_call_operand.vmem [shape: f32[1,32], index: 1, kind: input, shape index: {}]
  %s2 = inlined_call_operand.vmem [shape: f32[1,32], index: 2, kind: input, shape index: {}]
  %s3 = inlined_call_operand.vmem [shape: bf16[32,96], index: 3, kind: input, shape index: {}]
  %s4 = inlined_call_operand.vmem [shape: f32[1,96], index: 4, kind: input, shape index: {}]
  %s5 = inlined_call_operand.vmem [shape: bf16[32,96], index: 5, kind: output, shape index: {}]
  %s6 = sld [smem:[#allocation0]]
  $region34: #{_lambda_.13} parent=0
    _
  %s8 = ssub.s32 1, %s6
  %s9 = scalar_select 0, %s8, %s6
  // Predicated region
  $region2: #{_lambda_.13} parent=0 // pred_check
    _
  $region3: #{_lambda_.13} parent=0 // pred_check_branch
    %11 = sbr.rel (0) target = $region5
  $region4: #{_lambda_.13} parent=0 // pred_region
    _
  $region5: #{_lambda_.13} parent=0 // pred_fallthru
    _
  // Predicated region
  $region6: #{_lambda_.13} parent=0 // pred_check
    _
  $region7: #{_lambda_.13} parent=0 // pred_check_branch
    %13 = sbr.rel (0) target = $region9
  $region8: #{_lambda_.13} parent=0 // pred_region
    _
  $region9: #{_lambda_.13} parent=0 // pred_fallthru
    _
  // Predicated region
  $region10: #{_lambda_.13} parent=0 // pred_check
    _
  $region11: #{_lambda_.13} parent=0 // pred_check_branch
    %15 = sbr.rel (0) target = $region13
  $region12: #{_lambda_.13} parent=0 // pred_region
    _
  $region13: #{_lambda_.13} parent=0 // pred_fallthru
    _
  // Predicated region
  $region14: #{_lambda_.13} parent=0 // pred_check
    _
  $region15: #{_lambda_.13} parent=0 // pred_check_branch
    %17 = sbr.rel (0) target = $region17
  $region16: #{_lambda_.13} parent=0 // pred_region
    _
  $region17: #{_lambda_.13} parent=0 // pred_fallthru
    _
  // Predicated region
  $region18: #{_lambda_.13} parent=0 // pred_check
    _
  $region19: #{_lambda_.13} parent=0 // pred_check_branch
    %19 = sbr.rel (0) target = $region21
  $region20: #{_lambda_.13} parent=0 // pred_region
    _
  $region21: #{_lambda_.13} parent=0 // pred_fallthru
    _
  %p21 = scmp.eq.s32.totalorder 0, 0
  // Predicated region
  $region22: #{_lambda_.13} parent=0 // pred_check
    %p22 = pneg %p21
  $region23: #{_lambda_.13} parent=0 // pred_check_branch
    %24 = sbr.rel (%p22) target = $region25
  $region24: #{_lambda_.13} parent=0 // pred_region
    %v25 = vld [vmem:[%s0] sm:$0xf]
    %v26 = vld [vmem:[%s0 + $0x4] sm:$0xf]
    %v27 = vld [vmem:[%s0 + $0x8] sm:$0xf]
    %v28 = vld [vmem:[%s0 + $0xc] sm:$0xf]
    %v29 = vunpack.c.l.bf16 %v25
    %v30 = vunpack.c.l.bf16 %v26
    %v31 = vunpack.c.l.bf16 %v27
    %v32 = vunpack.c.l.bf16 %v28
    %vm33 = vcmask 261120
    %v34 = vsel %vm33, %v29, 0.0
    %35 = vadd.xlane.f32.xlu0 %v34
    %v36 = vpop.xlane.xlu0 %35
    %v37 = vsel %vm33, %v30, 0.0
    %38 = vadd.xlane.f32.xlu0 %v37
    %v39 = vpop.xlane.xlu0 %38
    %v40 = vsel %vm33, %v31, 0.0
    %41 = vadd.xlane.f32.xlu0 %v40
    %v42 = vpop.xlane.xlu0 %41
    %v43 = vsel %vm33, %v32, 0.0
    %44 = vadd.xlane.f32.xlu0 %v43
    %v45 = vpop.xlane.xlu0 %44
    %v46 = vrcp.pop 32.0
    %v47 = vmul.f32 %v36, %v46
    %v48 = vmul.f32 %v39, %v46
    %v49 = vmul.f32 %v42, %v46
    %v50 = vmul.f32 %v45, %v46
    %v51 = vsub.f32 %v29, %v47
    %v52 = vsub.f32 %v30, %v48
    %v53 = vsub.f32 %v31, %v49
    %v54 = vsub.f32 %v32, %v50
    %v55 = vmul.f32 %v51, %v51
    %v56 = vmul.f32 %v52, %v52
    %v57 = vmul.f32 %v53, %v53
    %v58 = vmul.f32 %v54, %v54
    %v59 = vsel %vm33, %v55, 0.0
    %60 = vadd.xlane.f32.xlu0 %v59
    %v61 = vpop.xlane.xlu0 %60
    %v62 = vsel %vm33, %v56, 0.0
    %63 = vadd.xlane.f32.xlu0 %v62
    %v64 = vpop.xlane.xlu0 %63
    %v65 = vsel %vm33, %v57, 0.0
    %66 = vadd.xlane.f32.xlu0 %v65
    %v67 = vpop.xlane.xlu0 %66
    %v68 = vsel %vm33, %v58, 0.0
    %69 = vadd.xlane.f32.xlu0 %v68
    %v70 = vpop.xlane.xlu0 %69
    %v71 = vmul.f32 %v61, %v46
    %v72 = vmul.f32 %v64, %v46
    %v73 = vmul.f32 %v67, %v46
    %v74 = vmul.f32 %v70, %v46
    %v75 = vadd.f32 %v71, 1e-12
    %v76 = vadd.f32 %v72, 1e-12
    %v77 = vadd.f32 %v73, 1e-12
    %v78 = vadd.f32 %v74, 1e-12
    %v79 = vrsqrt.pop %v75
    %v80 = vrsqrt.pop %v76
    %v81 = vrsqrt.pop %v77
    %v82 = vrsqrt.pop %v78
    %v83 = vmul.f32 %v51, %v79
    %v84 = vmul.f32 %v52, %v80
    %v85 = vmul.f32 %v53, %v81
    %v86 = vmul.f32 %v54, %v82
    %v87 = vld [vmem:[%s1] sm:$0x1]
    %v89 = vlaneseq
    %v90 = vshrl.u32 %v89, 7
    %v91 = vsub.s32 0, %v90
    %v92 = vrot.slane %v87, %v91
    %v94 = vmul.f32 %v83, %v92
    %v95 = vmul.f32 %v84, %v92
    %v96 = vmul.f32 %v85, %v92
    %v97 = vmul.f32 %v86, %v92
    %v98 = vld [vmem:[%s2] sm:$0x1]
    %v100 = vlaneseq
    %v101 = vshrl.u32 %v100, 7
    %v102 = vsub.s32 0, %v101
    %v103 = vrot.slane %v98, %v102
    %v105 = vadd.f32 %v94, %v103
    %v106 = vadd.f32 %v95, %v103
    %v107 = vadd.f32 %v96, %v103
    %v108 = vadd.f32 %v97, %v103
    %v109 = vpack.c.bf16 %v106, %v105
    %v110 = vpack.c.bf16 %v108, %v107
    %111 = vst.msk [vmem:[#allocation2] sm:$0xff] %vm33, %v109
    %112 = vst.msk [vmem:[#allocation2 + $0x8] sm:$0xff] %vm33, %v110
  $region25: #{_lambda_.13} parent=0 // pred_fallthru
    _
  %v113 = vld [vmem:[#allocation2] sm:$0xff]
  %v114 = vld [vmem:[#allocation2 + $0x8] sm:$0xff]
  %v115 = vld [vmem:[%s3] sm:$0xf]
  %v116 = vld [vmem:[%s3 + $0x4] sm:$0xf]
  %v117 = vld [vmem:[%s3 + $0x8] sm:$0xf]
  %v118 = vld [vmem:[%s3 + $0xc] sm:$0xf]
  %v119 = vld [vmem:[%s4] sm:$0x1]
  %v121 = vlaneseq
  %v122 = vshrl.u32 %v121, 7
  %v123 = vsub.s32 0, %v122
  %v124 = vrot.slane %v119, %v123
  %v130 = vunpack.c.l.b16 %v115
  %v131 = vunpack.c.l.b16 %v116
  %v132 = vunpack.c.l.b16 %v117
  %v133 = vunpack.c.l.b16 %v118
  %v134 = vpack.c.b16 %v131, %v130
  %v135 = vpack.c.b16 %v133, %v132
  %vm138 = vcmask 261120
  %v140 = vsel %vm138, %v113, 0
  %v143 = vsel %vm138, %v114, 0
  %145 = vmatprep.subr.bf16.mxu0 0
  %146 = vmatpush1.bf16.msra.mxu0 %v134
  %147 = vmatprep.subr.bf16.mxu0 0
  %148 = vmatpush1.bf16.msra.mxu0 %v135
  %149 = vmatprep.subr.bf16.mxu0 0
  %150 = vmatpush1.bf16.msra.mxu0 0
  %151 = vmatprep.subr.bf16.mxu0 0
  %152 = vmatpush1.bf16.msra.mxu0 0
  %153 = vmatprep.subr.bf16.mxu0 0
  %154 = vmatpush1.bf16.msra.mxu0 0
  %155 = vmatprep.subr.bf16.mxu0 0
  %156 = vmatpush1.bf16.msra.mxu0 0
  %157 = vmatprep.subr.bf16.mxu0 0
  %158 = vmatpush1.bf16.msra.mxu0 0
  %159 = vmatprep.subr.bf16.mxu0 0
  %160 = vmatpush1.bf16.msra.mxu0 0
  %161 = vmatprep.subr.bf16.mxu0 0
  %162 = vmatpush1.bf16.msra.mxu0 0
  %163 = vmatprep.subr.bf16.mxu0 0
  %164 = vmatpush1.bf16.msra.mxu0 0
  %165 = vmatprep.subr.bf16.mxu0 0
  %166 = vmatpush1.bf16.msra.mxu0 0
  %167 = vmatprep.subr.bf16.mxu0 0
  %168 = vmatpush1.bf16.msra.mxu0 0
  %169 = vmatprep.subr.bf16.mxu0 0
  %170 = vmatpush1.bf16.msra.mxu0 0
  %171 = vmatprep.subr.bf16.mxu0 0
  %172 = vmatpush1.bf16.msra.mxu0 0
  %173 = vmatprep.subr.bf16.mxu0 0
  %174 = vmatpush1.bf16.msra.mxu0 0
  %175 = vmatprep.subr.bf16.mxu0 0
  %176 = vmatpush1.bf16.msra.mxu0 0
  %177 = vmatprep.mubr.bf16.mxu0 0
  %178 = vmatmul.mubr.bf16.gmra.mrb[0].mxu0 %v140
  %v179 = vpop.f32.mrb[0].mxu0
  %v180 = vadd.f32 %v124, %v179
  %v181 = vpop.f32.mrb[0].mxu0
  %v182 = vpop.f32.mrb[0].mxu0
  %v183 = vadd.f32 %v124, %v182
  %v184 = vpop.f32.mrb[0].mxu0
  %185 = vmatprep.mubr.bf16.mxu0 0
  %186 = vmatmul.mubr.bf16.gmra.mrb[0].mxu0 %v143
  %v187 = vpop.f32.mrb[0].mxu0
  %v188 = vadd.f32 %v124, %v187
  %v189 = vpop.f32.mrb[0].mxu0
  %v190 = vpop.f32.mrb[0].mxu0
  %v191 = vadd.f32 %v124, %v190
  %v192 = vpop.f32.mrb[0].mxu0
  %193 = vdwg.mxu0
  %v194 = vpack.c.bf16 %v183, %v180
  %v195 = vpack.c.bf16 %v191, %v188
  %v198 = vunpack.c.l.b16 %v194
  %v199 = vunpack.c.h.b16 %v194
  %v200 = vunpack.c.l.b16 %v195
  %v201 = vunpack.c.h.b16 %v195
  %v202 = vpack.c.b16 %v198, %v198
  %v203 = vpack.c.b16 %v199, %v199
  %v204 = vpack.c.b16 %v200, %v200
  %v205 = vpack.c.b16 %v201, %v201
  %vm210 = vcmask 781312
  %211 = vst.msk [vmem:[%s5] sm:$0xf] %vm210, %v202
  %212 = vst.msk [vmem:[%s5 + $0x4] sm:$0xf] %vm210, %v203
  %213 = vst.msk [vmem:[%s5 + $0x8] sm:$0xf] %vm210, %v204
  %214 = vst.msk [vmem:[%s5 + $0xc] sm:$0xf] %vm210, %v205
  // Predicated region
  $region26: #{_lambda_.13} parent=0 // pred_check
    _
  $region27: #{_lambda_.13} parent=0 // pred_check_branch
    %216 = sbr.rel (0) target = $region29
  $region28: #{_lambda_.13} parent=0 // pred_region
    _
  $region29: #{_lambda_.13} parent=0 // pred_fallthru
    _
  // Predicated region
  $region30: #{_lambda_.13} parent=0 // pred_check
    _
  $region31: #{_lambda_.13} parent=0 // pred_check_branch
    %218 = sbr.rel (0) target = $region33
  $region32: #{_lambda_.13} parent=0 // pred_region
    _
  $region33: #{_lambda_.13} parent=0 // pred_fallthru
    _

// kernel: _lambda_.14
$region0: #{_lambda_.14}
  #allocation0 [shape = 'u32[]', space=smem, size = 0x4, offset = 0x4, fixed_abs, tag = 'smem constant byte address 0x4 - core index']
  #allocation1 [shape = 'u32[144,128]{1,0:T(1,128)}', space=vmem, size = 0x12000, scoped, tag = 'internal scratch']
  %s0 = inlined_call_operand.vmem [shape: bf16[2,4,16,8], index: 0, kind: input, shape index: {}]
  %s1 = inlined_call_operand.vmem [shape: bf16[2,4,16,8], index: 1, kind: input, shape index: {}]
  %s2 = inlined_call_operand.vmem [shape: bf16[2,4,16,8], index: 2, kind: input, shape index: {}]
  %s3 = inlined_call_operand.vmem [shape: bf16[2,4,16,8], index: 3, kind: output, shape index: {}]
  %s4 = sld [smem:[#allocation0]]
  $region45: #{_lambda_.14} parent=0
    _
  %s6 = ssub.s32 1, %s4
  %s7 = scalar_select 0, %s6, %s4
  loop: start=0, step=1, limit=10
  $region2: #{_lambda_.14} parent=0 // loop_pre_header
    _
  $region3: #{_lambda_.14} parent=0 // loop_header
    %s9 = sphi 0, %s13
    %p10 = scmp.ge.s32.totalorder %s9, 10
    %s16 = sphi 0, %s28
    %s17 = sphi 0, %s24
    %s18 = sphi 0, %s16
    %s19 = sphi 0, %s17
    %s20 = sphi 0, %s18
    %s21 = sphi 0, %s19
    %s33 = sphi 0, %s35
    %s36 = sphi 0, %s33
    %s37 = sphi 0, %s36
    %s53 = sphi 0, %s37
    %s61 = sphi 0, %s63
    %s64 = sphi 0, %s61
    %s65 = sphi 0, %s64
    %s81 = sphi 0, %s65
    %s89 = sphi 0, %s91
    %s92 = sphi 0, %s89
    %s93 = sphi 0, %s92
    %s109 = sphi 0, %s93
    %s117 = sphi 0, %s119
    %s120 = sphi 0, %s117
    %s121 = sphi 0, %s120
    %s137 = sphi 0, %s121
  $region4: #{_lambda_.14} parent=0 // loop_header_branch
    %12 = sbr.rel (%p10) target = $region8
  $region5: #{_lambda_.14} parent=0 // loop_body
    %s14 = ssub.s32 %s9, 1
    %s15 = ssub.s32 %s9, 2
    %s22 = sadd.s32 1, %s17
    %p23 = scmp.ge.s32.totalorder %s22, 4
    %s24 = scalar_select %p23, 0, %s22
    %s25 = sadd.s32 1, %s16
    %s26 = scalar_select %p23, %s25, %s16
    %p27 = scmp.ge.s32.totalorder %s26, 2
    %s28 = scalar_select %p27, 0, %s26
    %s29 = ssub.s32 %s16, %s28
    %s30 = ssub.s32 %s17, %s24
    %s31 = sor.u32 %s29, %s30
    %p32 = scmp.eq.s32.totalorder %s31, 0
    %s34 = sadd.s32 %s33, 1
    %s35 = scalar_select %p32, %s33, %s34
    %p38 = pneg %p32
    %p39 = scmp.eq.s32.totalorder %s9, 7
    %p40 = por %p38, %p39
    %p41 = scmp.ne.s32.totalorder %s33, %s36
    %p42 = scmp.eq.s32.totalorder %s9, 0
    %p43 = por %p41, %p42
    %p44 = scmp.ne.s32.totalorder %s33, %s36
    %p45 = scmp.eq.s32.totalorder %s14, 7
    %p46 = por %p44, %p45
    %p47 = scmp.ne.s32.totalorder %s36, %s37
    %p48 = scmp.eq.s32.totalorder %s14, 0
    %p49 = por %p47, %p48
    %p50 = scmp.ne.s32.totalorder %s36, %s37
    %p51 = scmp.eq.s32.totalorder %s15, 7
    %p52 = por %p50, %p51
    %p54 = scmp.ne.s32.totalorder %s37, %s53
    %p55 = scmp.eq.s32.totalorder %s15, 0
    %p56 = por %p54, %p55
    %s57 = ssub.s32 %s16, %s28
    %s58 = ssub.s32 %s17, %s24
    %s59 = sor.u32 %s57, %s58
    %p60 = scmp.eq.s32.totalorder %s59, 0
    %s62 = sadd.s32 %s61, 1
    %s63 = scalar_select %p60, %s61, %s62
    %p66 = pneg %p60
    %p67 = scmp.eq.s32.totalorder %s9, 7
    %p68 = por %p66, %p67
    %p69 = scmp.ne.s32.totalorder %s61, %s64
    %p70 = scmp.eq.s32.totalorder %s9, 0
    %p71 = por %p69, %p70
    %p72 = scmp.ne.s32.totalorder %s61, %s64
    %p73 = scmp.eq.s32.totalorder %s14, 7
    %p74 = por %p72, %p73
    %p75 = scmp.ne.s32.totalorder %s64, %s65
    %p76 = scmp.eq.s32.totalorder %s14, 0
    %p77 = por %p75, %p76
    %p78 = scmp.ne.s32.totalorder %s64, %s65
    %p79 = scmp.eq.s32.totalorder %s15, 7
    %p80 = por %p78, %p79
    %p82 = scmp.ne.s32.totalorder %s65, %s81
    %p83 = scmp.eq.s32.totalorder %s15, 0
    %p84 = por %p82, %p83
    %s85 = ssub.s32 %s16, %s28
    %s86 = ssub.s32 %s17, %s24
    %s87 = sor.u32 %s85, %s86
    %p88 = scmp.eq.s32.totalorder %s87, 0
    %s90 = sadd.s32 %s89, 1
    %s91 = scalar_select %p88, %s89, %s90
    %p94 = pneg %p88
    %p95 = scmp.eq.s32.totalorder %s9, 7
    %p96 = por %p94, %p95
    %p97 = scmp.ne.s32.totalorder %s89, %s92
    %p98 = scmp.eq.s32.totalorder %s9, 0
    %p99 = por %p97, %p98
    %p100 = scmp.ne.s32.totalorder %s89, %s92
    %p101 = scmp.eq.s32.totalorder %s14, 7
    %p102 = por %p100, %p101
    %p103 = scmp.ne.s32.totalorder %s92, %s93
    %p104 = scmp.eq.s32.totalorder %s14, 0
    %p105 = por %p103, %p104
    %p106 = scmp.ne.s32.totalorder %s92, %s93
    %p107 = scmp.eq.s32.totalorder %s15, 7
    %p108 = por %p106, %p107
    %p110 = scmp.ne.s32.totalorder %s93, %s109
    %p111 = scmp.eq.s32.totalorder %s15, 0
    %p112 = por %p110, %p111
    %s113 = ssub.s32 %s16, %s28
    %s114 = ssub.s32 %s17, %s24
    %s115 = sor.u32 %s113, %s114
    %p116 = scmp.eq.s32.totalorder %s115, 0
    %s118 = sadd.s32 %s117, 1
    %s119 = scalar_select %p116, %s117, %s118
    %p122 = pneg %p116
    %p123 = scmp.eq.s32.totalorder %s9, 7
    %p124 = por %p122, %p123
    %p125 = scmp.ne.s32.totalorder %s117, %s120
    %p126 = scmp.eq.s32.totalorder %s9, 0
    %p127 = por %p125, %p126
    %p128 = scmp.ne.s32.totalorder %s117, %s120
    %p129 = scmp.eq.s32.totalorder %s14, 7
    %p130 = por %p128, %p129
    %p131 = scmp.ne.s32.totalorder %s120, %s121
    %p132 = scmp.eq.s32.totalorder %s14, 0
    %p133 = por %p131, %p132
    %p134 = scmp.ne.s32.totalorder %s120, %s121
    %p135 = scmp.eq.s32.totalorder %s15, 7
    %p136 = por %p134, %p135
    %p138 = scmp.ne.s32.totalorder %s121, %s137
    %p139 = scmp.eq.s32.totalorder %s15, 0
    %p140 = por %p138, %p139
    %p141 = scmp.le.s32.totalorder 1, %s9
    %p142 = scmp.lt.s32.totalorder %s9, 9
    %p143 = pnand %p141, %p142
    %p144 = pneg %p143
    // Predicated region
    $region9: #{_lambda_.14} parent=5 // pred_check
      _
    $region10: #{_lambda_.14} parent=5 // pred_check_branch
      %146 = sbr.rel (%p143) target = $region12
    $region11: #{_lambda_.14} parent=5 // pred_region
      %s147 = ssub.s32 %s9, 1
    $region12: #{_lambda_.14} parent=5 // pred_fallthru
      _
    %p148 = scmp.lt.s32.totalorder %s9, 8
    // Predicated region
    $region13: #{_lambda_.14} parent=5 // pred_check
      %p149 = pneg %p148
    $region14: #{_lambda_.14} parent=5 // pred_check_branch
      %151 = sbr.rel (%p149) target = $region16
    $region15: #{_lambda_.14} parent=5 // pred_region
      // Predicated region
      $region17: #{_lambda_.14} parent=15 // pred_check
        %p152 = pneg %p43
      $region18: #{_lambda_.14} parent=15 // pred_check_branch
        %154 = sbr.rel (%p152) target = $region20
      $region19: #{_lambda_.14} parent=15 // pred_region
        %p155 = scmp.lt.s32.totalorder %s16, 1
        %s156 = scalar_select %p155, %s16, 1
        %p157 = scmp.lt.s32.totalorder %s17, 3
        %s158 = scalar_select %p157, %s17, 3
        %s159 = smul.addr %s158, 2
        %s160 = smul.addr %s156, 8
        %s161 = sadd.s32 %s159, %s160
        %s162 = smul.addr %s161, 4
        %s163 = scalar_lea.vmem %s0, %s162
      $region20: #{_lambda_.14} parent=15 // pred_fallthru
        _
      // Predicated region
      $region21: #{_lambda_.14} parent=15 // pred_check
        %p164 = pneg %p71
      $region22: #{_lambda_.14} parent=15 // pred_check_branch
        %166 = sbr.rel (%p164) target = $region24
      $region23: #{_lambda_.14} parent=15 // pred_region
        %p167 = scmp.lt.s32.totalorder %s16, 1
        %s168 = scalar_select %p167, %s16, 1
        %p169 = scmp.lt.s32.totalorder %s17, 3
        %s170 = scalar_select %p169, %s17, 3
        %s171 = smul.addr %s170, 2
        %s172 = smul.addr %s168, 8
        %s173 = sadd.s32 %s171, %s172
        %s174 = smul.addr %s173, 4
        %s175 = scalar_lea.vmem %s1, %s174
      $region24: #{_lambda_.14} parent=15 // pred_fallthru
        _
      // Predicated region
      $region25: #{_lambda_.14} parent=15 // pred_check
        %p176 = pneg %p99
      $region26: #{_lambda_.14} parent=15 // pred_check_branch
        %178 = sbr.rel (%p176) target = $region28
      $region27: #{_lambda_.14} parent=15 // pred_region
        %p179 = scmp.lt.s32.totalorder %s16, 1
        %s180 = scalar_select %p179, %s16, 1
        %p181 = scmp.lt.s32.totalorder %s17, 3
        %s182 = scalar_select %p181, %s17, 3
        %s183 = smul.addr %s182, 2
        %s184 = smul.addr %s180, 8
        %s185 = sadd.s32 %s183, %s184
        %s186 = smul.addr %s185, 4
        %s187 = scalar_lea.vmem %s2, %s186
      $region28: #{_lambda_.14} parent=15 // pred_fallthru
        _
    $region16: #{_lambda_.14} parent=5 // pred_fallthru
      _
    %p188 = scmp.le.s32.totalorder 1, %s9
    %p189 = scmp.lt.s32.totalorder %s9, 9
    %p190 = pnand %p188, %p189
    %p191 = pneg %p190
    // Predicated region
    $region29: #{_lambda_.14} parent=5 // pred_check
      _
    $region30: #{_lambda_.14} parent=5 // pred_check_branch
      %193 = sbr.rel (%p190) target = $region32
    $region31: #{_lambda_.14} parent=5 // pred_region
      %s194 = ssub.s32 %s9, 1
      %p195 = scmp.lt.s32.totalorder %s18, 1
      %s196 = scalar_select %p195, %s18, 1
      %p197 = scmp.lt.s32.totalorder %s19, 3
      %s198 = scalar_select %p197, %s19, 3
      %s199 = smul.addr %s198, 2
      %s200 = smul.addr %s196, 8
      %s201 = sadd.s32 %s199, %s200
      %s202 = smul.addr %s201, 4
      %s203 = scalar_lea.vmem %s0, %s202
      %p204 = pneg %p49
      %p205 = pneg %p46
      %p206 = scmp.lt.s32.totalorder %s18, 1
      %s207 = scalar_select %p206, %s18, 1
      %p208 = scmp.lt.s32.totalorder %s19, 3
      %s209 = scalar_select %p208, %s19, 3
      %s210 = smul.addr %s209, 2
      %s211 = smul.addr %s207, 8
      %s212 = sadd.s32 %s210, %s211
      %s213 = smul.addr %s212, 4
      %s214 = scalar_lea.vmem %s1, %s213
      %p215 = pneg %p77
      %p216 = pneg %p74
      %p217 = scmp.lt.s32.totalorder %s18, 1
      %s218 = scalar_select %p217, %s18, 1
      %p219 = scmp.lt.s32.totalorder %s19, 3
      %s220 = scalar_select %p219, %s19, 3
      %s221 = smul.addr %s220, 2
      %s222 = smul.addr %s218, 8
      %s223 = sadd.s32 %s221, %s222
      %s224 = smul.addr %s223, 4
      %s225 = scalar_lea.vmem %s2, %s224
      %p226 = pneg %p105
      %p227 = pneg %p102
      %p228 = pneg %p133
      %p229 = pneg %p130
      %p230 = scmp.lt.s32.totalorder %s18, 1
      %s231 = scalar_select %p230, %s18, 1
      %p232 = scmp.lt.s32.totalorder %s19, 3
      %s233 = scalar_select %p232, %s19, 3
      %s234 = smul.addr %s233, 2
      %s235 = smul.addr %s231, 8
      %s236 = sadd.s32 %s234, %s235
      %s237 = smul.addr %s236, 4
      %s238 = scalar_lea.vmem %s3, %s237
      %p239 = scmp.lt.s32.totalorder %s18, 1
      %s240 = scalar_select %p239, %s18, 1
      %p241 = scmp.lt.s32.totalorder %s19, 3
      %s242 = scalar_select %p241, %s19, 3
      %s243 = smul.addr %s242, 2
      %s244 = smul.addr %s240, 8
      %s245 = sadd.s32 %s243, %s244
      %s246 = smul.addr %s245, 4
      %s247 = scalar_lea.vmem %s0, %s246
      %p248 = scmp.lt.s32.totalorder %s18, 1
      %s249 = scalar_select %p248, %s18, 1
      %p250 = scmp.lt.s32.totalorder %s19, 3
      %s251 = scalar_select %p250, %s19, 3
      %s252 = smul.addr %s251, 2
      %s253 = smul.addr %s249, 8
      %s254 = sadd.s32 %s252, %s253
      %s255 = smul.addr %s254, 4
      %s256 = scalar_lea.vmem %s1, %s255
      %p257 = scmp.lt.s32.totalorder %s18, 1
      %s258 = scalar_select %p257, %s18, 1
      %p259 = scmp.lt.s32.totalorder %s19, 3
      %s260 = scalar_select %p259, %s19, 3
      %s261 = smul.addr %s260, 2
      %s262 = smul.addr %s258, 8
      %s263 = sadd.s32 %s261, %s262
      %s264 = smul.addr %s263, 4
      %s265 = scalar_lea.vmem %s2, %s264
      %p266 = scmp.lt.s32.totalorder %s18, 1
      %s267 = scalar_select %p266, %s18, 1
      %p268 = scmp.lt.s32.totalorder %s19, 3
      %s269 = scalar_select %p268, %s19, 3
      %s270 = smul.addr %s269, 2
      %s271 = smul.addr %s267, 8
      %s272 = sadd.s32 %s270, %s271
      %s273 = smul.addr %s272, 4
      %s274 = scalar_lea.vmem %s3, %s273
      %v276 = vld [vmem:[%s247] sm:$0xf]
      %v277 = vld [vmem:[%s247 + $0x4] sm:$0xf]
      %v278 = vld [vmem:[%s256] sm:$0xf]
      %v279 = vld [vmem:[%s256 + $0x4] sm:$0xf]
      %v280 = vld [vmem:[%s265] sm:$0xf]
      %v281 = vld [vmem:[%s265 + $0x4] sm:$0xf]
      %v284 = vunpack.c.l.b16 %v276
      %v285 = vunpack.c.l.b16 %v277
      %v286 = vpack.c.b16 %v285, %v284
      %v289 = vunpack.c.l.b16 %v278
      %v290 = vunpack.c.l.b16 %v279
      %v291 = vpack.c.b16 %v290, %v289
      %vm292 = vcmask 64512
      %v294 = vsel %vm292, %v286, 0
      %v297 = vsel %vm292, %v291, 0
      %299 = vmatprep.subr.bf16.mxu0 0
      %300 = vmatpush1.bf16.xpose.msra.mxu0 %v297
      %301 = vmatprep.subr.bf16.mxu0 0
      %302 = vmatpush1.bf16.xpose.msra.mxu0 0
      %303 = vmatprep.subr.bf16.mxu0 0
      %304 = vmatpush1.bf16.xpose.msra.mxu0 0
      %305 = vmatprep.subr.bf16.mxu0 0
      %306 = vmatpush1.bf16.xpose.msra.mxu0 0
      %307 = vmatprep.subr.bf16.mxu0 0
      %308 = vmatpush1.bf16.xpose.msra.mxu0 0
      %309 = vmatprep.subr.bf16.mxu0 0
      %310 = vmatpush1.bf16.xpose.msra.mxu0 0
      %311 = vmatprep.subr.bf16.mxu0 0
      %312 = vmatpush1.bf16.xpose.msra.mxu0 0
      %313 = vmatprep.subr.bf16.mxu0 0
      %314 = vmatpush1.bf16.xpose.msra.mxu0 0
      %315 = vmatprep.subr.bf16.mxu0 0
      %316 = vmatpush1.bf16.xpose.msra.mxu0 0
      %317 = vmatprep.subr.bf16.mxu0 0
      %318 = vmatpush1.bf16.xpose.msra.mxu0 0
      %319 = vmatprep.subr.bf16.mxu0 0
      %320 = vmatpush1.bf16.xpose.msra.mxu0 0
      %321 = vmatprep.subr.bf16.mxu0 0
      %322 = vmatpush1.bf16.xpose.msra.mxu0 0
      %323 = vmatprep.subr.bf16.mxu0 0
      %324 = vmatpush1.bf16.xpose.msra.mxu0 0
      %325 = vmatprep.subr.bf16.mxu0 0
      %326 = vmatpush1.bf16.xpose.msra.mxu0 0
      %327 = vmatprep.subr.bf16.mxu0 0
      %328 = vmatpush1.bf16.xpose.msra.mxu0 0
      %329 = vmatprep.subr.bf16.mxu0 0
      %330 = vmatpush1.bf16.xpose.msra.mxu0 0
      %331 = vmatprep.mubr.bf16.mxu0 0
      %332 = vmatmul.mubr.bf16.gmra.mrb[0].mxu0 %v294
      %v333 = vpop.f32.mrb[0].mxu0
      %v334 = vadd.f32 0.0, %v333
      %v335 = vpop.f32.mrb[0].mxu0
      %v336 = vpop.f32.mrb[0].mxu0
      %v337 = vadd.f32 0.0, %v336
      %v338 = vpop.f32.mrb[0].mxu0
      %339 = vdwg.mxu0
      %v340 = vlaneseq
      %v341 = vand.u32 %v340, 127
      %vm342 = vcmp.lt.s32.totalorder %v341, 5
      %v343 = vsel %vm342, %v334, -1e+30
      %v344 = vsel %vm342, %v337, -1e+30
      %vm345 = vcmask 130048
      %v346 = vsel %vm345, %v343, -inf
      %347 = vmax.xlane.f32.xlu0 %v346
      %v348 = vpop.xlane.xlu0 %347
      %v349 = vsel %vm345, %v344, -inf
      %350 = vmax.xlane.f32.xlu0 %v349
      %v351 = vpop.xlane.xlu0 %350
      %v352 = vsub.f32 %v343, %v348
      %v353 = vsub.f32 %v344, %v351
      %v354 = vmul.f32 %v352, 1.442695
      %v355 = vpow.pop %v354
      %v356 = vmul.f32 %v353, 1.442695
      %v357 = vpow.pop %v356
      %v358 = vsel %vm345, %v355, 0.0
      %359 = vadd.xlane.f32.xlu0 %v358
      %v360 = vpop.xlane.xlu0 %359
      %v361 = vsel %vm345, %v357, 0.0
      %362 = vadd.xlane.f32.xlu0 %v361
      %v363 = vpop.xlane.xlu0 %362
      %v364 = vrcp.pop %v360
      %v365 = vrcp.pop %v363
      %v366 = vmul.f32 %v355, %v364
      %v367 = vmul.f32 %v357, %v365
      %v368 = vpack.c.bf16 %v367, %v366
      %v371 = vunpack.c.l.b16 %v280
      %v372 = vunpack.c.l.b16 %v281
      %v373 = vpack.c.b16 %v372, %v371
      %v376 = vsel %vm345, %v368, 0
      %378 = vmatprep.subr.bf16.mxu0 0
      %379 = vmatpush1.bf16.msra.mxu0 %v373
      %380 = vmatprep.subr.bf16.mxu0 0
      %381 = vmatpush1.bf16.msra.mxu0 0
      %382 = vmatprep.subr.bf16.mxu0 0
      %383 = vmatpush1.bf16.msra.mxu0 0
      %384 = vmatprep.subr.bf16.mxu0 0
      %385 = vmatpush1.bf16.msra.mxu0 0
      %386 = vmatprep.subr.bf16.mxu0 0
      %387 = vmatpush1.bf16.msra.mxu0 0
      %388 = vmatprep.subr.bf16.mxu0 0
      %389 = vmatpush1.bf16.msra.mxu0 0
      %390 = vmatprep.subr.bf16.mxu0 0
      %391 = vmatpush1.bf16.msra.mxu0 0
      %392 = vmatprep.subr.bf16.mxu0 0
      %393 = vmatpush1.bf16.msra.mxu0 0
      %394 = vmatprep.subr.bf16.mxu0 0
      %395 = vmatpush1.bf16.msra.mxu0 0
      %396 = vmatprep.subr.bf16.mxu0 0
      %397 = vmatpush1.bf16.msra.mxu0 0
      %398 = vmatprep.subr.bf16.mxu0 0
      %399 = vmatpush1.bf16.msra.mxu0 0
      %400 = vmatprep.subr.bf16.mxu0 0
      %401 = vmatpush1.bf16.msra.mxu0 0
      %402 = vmatprep.subr.bf16.mxu0 0
      %403 = vmatpush1.bf16.msra.mxu0 0
      %404 = vmatprep.subr.bf16.mxu0 0
      %405 = vmatpush1.bf16.msra.mxu0 0
      %406 = vmatprep.subr.bf16.mxu0 0
      %407 = vmatpush1.bf16.msra.mxu0 0
      %408 = vmatprep.subr.bf16.mxu0 0
      %409 = vmatpush1.bf16.msra.mxu0 0
      %410 = vmatprep.mubr.bf16.mxu0 0
      %411 = vmatmul.mubr.bf16.gmra.mrb[0].mxu0 %v376
      %v412 = vpop.f32.mrb[0].mxu0
      %v413 = vadd.f32 0.0, %v412
      %v414 = vpop.f32.mrb[0].mxu0
      %v415 = vpop.f32.mrb[0].mxu0
      %v416 = vadd.f32 0.0, %v415
      %v417 = vpop.f32.mrb[0].mxu0
      %418 = vdwg.mxu0
      %v419 = vpack.c.bf16 %v416, %v413
      %v421 = vunpack.c.l.b16 %v419
      %v422 = vunpack.c.h.b16 %v419
      %v423 = vpack.c.b16 %v421, %v421
      %v424 = vpack.c.b16 %v422, %v422
      %vm427 = vcmask 60416
      %428 = vst.msk [vmem:[%s274] sm:$0xf] %vm427, %v423
      %429 = vst.msk [vmem:[%s274 + $0x4] sm:$0xf] %vm427, %v424
      %p430 = scmp.lt.s32.totalorder %s18, 1
      %s431 = scalar_select %p430, %s18, 1
      %p432 = scmp.lt.s32.totalorder %s19, 3
      %s433 = scalar_select %p432, %s19, 3
      %s434 = smul.addr %s433, 2
      %s435 = smul.addr %s431, 8
      %s436 = sadd.s32 %s434, %s435
      %s437 = smul.addr %s436, 4
      %s438 = scalar_lea.vmem %s3, %s437
      // Predicated region
      $region33: #{_lambda_.14} parent=31 // pred_check
        %p439 = pneg %p130
      $region34: #{_lambda_.14} parent=31 // pred_check_branch
        %441 = sbr.rel (%p439) target = $region36
      $region35: #{_lambda_.14} parent=31 // pred_region
        _
      $region36: #{_lambda_.14} parent=31 // pred_fallthru
        _
    $region32: #{_lambda_.14} parent=5 // pred_fallthru
      _
    %p442 = scmp.le.s32.totalorder 2, %s9
    // Predicated region
    $region37: #{_lambda_.14} parent=5 // pred_check
      %p443 = pneg %p442
    $region38: #{_lambda_.14} parent=5 // pred_check_branch
      %445 = sbr.rel (%p443) target = $region40
    $region39: #{_lambda_.14} parent=5 // pred_region
      %s446 = ssub.s32 %s9, 2
      // Predicated region
      $region41: #{_lambda_.14} parent=39 // pred_check
        %p447 = pneg %p136
      $region42: #{_lambda_.14} parent=39 // pred_check_branch
        %449 = sbr.rel (%p447) target = $region44
      $region43: #{_lambda_.14} parent=39 // pred_region
        %p450 = scmp.lt.s32.totalorder %s20, 1
        %s451 = scalar_select %p450, %s20, 1
        %p452 = scmp.lt.s32.totalorder %s21, 3
        %s453 = scalar_select %p452, %s21, 3
        %s454 = smul.addr %s453, 2
        %s455 = smul.addr %s451, 8
        %s456 = sadd.s32 %s454, %s455
        %s457 = smul.addr %s456, 4
        %s458 = scalar_lea.vmem %s3, %s457
      $region44: #{_lambda_.14} parent=39 // pred_fallthru
        _
    $region40: #{_lambda_.14} parent=5 // pred_fallthru
      _
  $region6: #{_lambda_.14} parent=0 // loop_footer
    %s13 = sadd.s32 1, %s9
  $region7: #{_lambda_.14} parent=0 // loop_footer_branch
    %8 = sbr.rel target = $region3
  $region8: #{_lambda_.14} parent=0 // loop_exit
    _

// kernel: _lambda_.17
$region0: #{_lambda_.17}
  #allocation0 [shape = 'u32[]', space=smem, size = 0x4, offset = 0x4, fixed_abs, tag = 'smem constant byte address 0x4 - core index']
  #allocation1 [shape = 'u32[144,128]{1,0:T(1,128)}', space=vmem, size = 0x12000, scoped, tag = 'internal scratch']
  #allocation2 [shape = 'f32[32,32]{1,0:T(8,128)}', space=vmem, size = 0x4000, scoped, tag = 'scratch operand']
  %s0 = inlined_call_operand.vmem [shape: bf16[32,64], index: 0, kind: input, shape index: {}]
  %s1 = inlined_call_operand.vmem [shape: bf16[64,32], index: 1, kind: input, shape index: {}]
  %s2 = inlined_call_operand.vmem [shape: f32[1,32], index: 2, kind: input, shape index: {}]
  %s3 = inlined_call_operand.vmem [shape: bf16[32,32], index: 3, kind: input, shape index: {}]
  %s4 = inlined_call_operand.vmem [shape: bf16[32,32], index: 4, kind: output, shape index: {}]
  %s5 = sld [smem:[#allocation0]]
  $region34: #{_lambda_.17} parent=0
    _
  %s7 = ssub.s32 1, %s5
  %s8 = scalar_select 0, %s7, %s5
  // Predicated region
  $region2: #{_lambda_.17} parent=0 // pred_check
    _
  $region3: #{_lambda_.17} parent=0 // pred_check_branch
    %10 = sbr.rel (0) target = $region5
  $region4: #{_lambda_.17} parent=0 // pred_region
    _
  $region5: #{_lambda_.17} parent=0 // pred_fallthru
    _
  // Predicated region
  $region6: #{_lambda_.17} parent=0 // pred_check
    _
  $region7: #{_lambda_.17} parent=0 // pred_check_branch
    %12 = sbr.rel (0) target = $region9
  $region8: #{_lambda_.17} parent=0 // pred_region
    _
  $region9: #{_lambda_.17} parent=0 // pred_fallthru
    _
  // Predicated region
  $region10: #{_lambda_.17} parent=0 // pred_check
    _
  $region11: #{_lambda_.17} parent=0 // pred_check_branch
    %14 = sbr.rel (0) target = $region13
  $region12: #{_lambda_.17} parent=0 // pred_region
    _
  $region13: #{_lambda_.17} parent=0 // pred_fallthru
    _
  // Predicated region
  $region14: #{_lambda_.17} parent=0 // pred_check
    _
  $region15: #{_lambda_.17} parent=0 // pred_check_branch
    %16 = sbr.rel (0) target = $region17
  $region16: #{_lambda_.17} parent=0 // pred_region
    _
  $region17: #{_lambda_.17} parent=0 // pred_fallthru
    _
  %p18 = scmp.eq.s32.totalorder 0, 0
  // Predicated region
  $region18: #{_lambda_.17} parent=0 // pred_check
    %p19 = pneg %p18
  $region19: #{_lambda_.17} parent=0 // pred_check_branch
    %21 = sbr.rel (%p19) target = $region21
  $region20: #{_lambda_.17} parent=0 // pred_region
    %vm22 = vcmask 261120
    %23 = vst.msk [vmem:[#allocation2] sm:$0xff] %vm22, 0.0
    %24 = vst.msk [vmem:[#allocation2 + $0x8] sm:$0xff] %vm22, 0.0
    %25 = vst.msk [vmem:[#allocation2 + $0x10] sm:$0xff] %vm22, 0.0
    %26 = vst.msk [vmem:[#allocation2 + $0x18] sm:$0xff] %vm22, 0.0
  $region21: #{_lambda_.17} parent=0 // pred_fallthru
    _
  %v27 = vld [vmem:[#allocation2] sm:$0xff]
  %v28 = vld [vmem:[#allocation2 + $0x8] sm:$0xff]
  %v29 = vld [vmem:[#allocation2 + $0x10] sm:$0xff]
  %v30 = vld [vmem:[#allocation2 + $0x18] sm:$0xff]
  %v31 = vld [vmem:[%s0] sm:$0xf]
  %v32 = vld [vmem:[%s0 + $0x4] sm:$0xf]
  %v33 = vld [vmem:[%s0 + $0x8] sm:$0xf]
  %v34 = vld [vmem:[%s0 + $0xc] sm:$0xf]
  %v35 = vld [vmem:[%s1] sm:$0xf]
  %v36 = vld [vmem:[%s1 + $0x4] sm:$0xf]
  %v37 = vld [vmem:[%s1 + $0x8] sm:$0xf]
  %v38 = vld [vmem:[%s1 + $0xc] sm:$0xf]
  %v39 = vld [vmem:[%s1 + $0x10] sm:$0xf]
  %v40 = vld [vmem:[%s1 + $0x14] sm:$0xf]
  %v41 = vld [vmem:[%s1 + $0x18] sm:$0xf]
  %v42 = vld [vmem:[%s1 + $0x1c] sm:$0xf]
  %v47 = vunpack.c.l.b16 %v31
  %v48 = vunpack.c.l.b16 %v32
  %v49 = vunpack.c.l.b16 %v33
  %v50 = vunpack.c.l.b16 %v34
  %v51 = vpack.c.b16 %v48, %v47
  %v52 = vpack.c.b16 %v50, %v49
  %v61 = vunpack.c.l.b16 %v35
  %v62 = vunpack.c.l.b16 %v36
  %v63 = vunpack.c.l.b16 %v37
  %v64 = vunpack.c.l.b16 %v38
  %v65 = vunpack.c.l.b16 %v39
  %v66 = vunpack.c.l.b16 %v40
  %v67 = vunpack.c.l.b16 %v41
  %v68 = vunpack.c.l.b16 %v42
  %v69 = vpack.c.b16 %v62, %v61
  %v70 = vpack.c.b16 %v64, %v63
  %v71 = vpack.c.b16 %v66, %v65
  %v72 = vpack.c.b16 %v68, %v67
  %vm77 = vcmask 523264
  %v79 = vsel %vm77, %v51, 0
  %v82 = vsel %vm77, %v52, 0
  %84 = vmatprep.subr.bf16.mxu0 0
  %85 = vmatpush1.bf16.msra.mxu0 %v69
  %86 = vmatprep.subr.bf16.mxu0 0
  %87 = vmatpush1.bf16.msra.mxu0 %v70
  %88 = vmatprep.subr.bf16.mxu0 0
  %89 = vmatpush1.bf16.msra.mxu0 %v71
  %90 = vmatprep.subr.bf16.mxu0 0
  %91 = vmatpush1.bf16.msra.mxu0 %v72
  %92 = vmatprep.subr.bf16.mxu0 0
  %93 = vmatpush1.bf16.msra.mxu0 0
  %94 = vmatprep.subr.bf16.mxu0 0
  %95 = vmatpush1.bf16.msra.mxu0 0
  %96 = vmatprep.subr.bf16.mxu0 0
  %97 = vmatpush1.bf16.msra.mxu0 0
  %98 = vmatprep.subr.bf16.mxu0 0
  %99 = vmatpush1.bf16.msra.mxu0 0
  %100 = vmatprep.subr.bf16.mxu0 0
  %101 = vmatpush1.bf16.msra.mxu0 0
  %102 = vmatprep.subr.bf16.mxu0 0
  %103 = vmatpush1.bf16.msra.mxu0 0
  %104 = vmatprep.subr.bf16.mxu0 0
  %105 = vmatpush1.bf16.msra.mxu0 0
  %106 = vmatprep.subr.bf16.mxu0 0
  %107 = vmatpush1.bf16.msra.mxu0 0
  %108 = vmatprep.subr.bf16.mxu0 0
  %109 = vmatpush1.bf16.msra.mxu0 0
  %110 = vmatprep.subr.bf16.mxu0 0
  %111 = vmatpush1.bf16.msra.mxu0 0
  %112 = vmatprep.subr.bf16.mxu0 0
  %113 = vmatpush1.bf16.msra.mxu0 0
  %114 = vmatprep.subr.bf16.mxu0 0
  %115 = vmatpush1.bf16.msra.mxu0 0
  %116 = vmatprep.mubr.bf16.mxu0 0
  %117 = vmatmul.mubr.bf16.gmra.mrb[0].mxu0 %v79
  %v118 = vpop.f32.mrb[0].mxu0
  %v119 = vadd.f32 0.0, %v118
  %v120 = vpop.f32.mrb[0].mxu0
  %v121 = vpop.f32.mrb[0].mxu0
  %v122 = vadd.f32 0.0, %v121
  %v123 = vpop.f32.mrb[0].mxu0
  %124 = vmatprep.mubr.bf16.mxu0 0
  %125 = vmatmul.mubr.bf16.gmra.mrb[0].mxu0 %v82
  %v126 = vpop.f32.mrb[0].mxu0
  %v127 = vadd.f32 0.0, %v126
  %v128 = vpop.f32.mrb[0].mxu0
  %v129 = vpop.f32.mrb[0].mxu0
  %v130 = vadd.f32 0.0, %v129
  %v131 = vpop.f32.mrb[0].mxu0
  %132 = vdwg.mxu0
  %v133 = vadd.f32 %v27, %v119
  %v134 = vadd.f32 %v28, %v122
  %v135 = vadd.f32 %v29, %v127
  %v136 = vadd.f32 %v30, %v130
  %vm137 = vcmask 261120
  %138 = vst.msk [vmem:[#allocation2] sm:$0xff] %vm137, %v133
  %139 = vst.msk [vmem:[#allocation2 + $0x8] sm:$0xff] %vm137, %v134
  %140 = vst.msk [vmem:[#allocation2 + $0x10] sm:$0xff] %vm137, %v135
  %141 = vst.msk [vmem:[#allocation2 + $0x18] sm:$0xff] %vm137, %v136
  // Predicated region
  $region22: #{_lambda_.17} parent=0 // pred_check
    %p142 = pneg %p18
  $region23: #{_lambda_.17} parent=0 // pred_check_branch
    %144 = sbr.rel (%p142) target = $region25
  $region24: #{_lambda_.17} parent=0 // pred_region
    %v145 = vld [vmem:[#allocation2] sm:$0xff]
    %v146 = vld [vmem:[#allocation2 + $0x8] sm:$0xff]
    %v147 = vld [vmem:[#allocation2 + $0x10] sm:$0xff]
    %v148 = vld [vmem:[#allocation2 + $0x18] sm:$0xff]
    %v149 = vld [vmem:[%s2] sm:$0x1]
    %v151 = vlaneseq
    %v152 = vshrl.u32 %v151, 7
    %v153 = vsub.s32 0, %v152
    %v154 = vrot.slane %v149, %v153
    %v156 = vadd.f32 %v145, %v154
    %v157 = vadd.f32 %v146, %v154
    %v158 = vadd.f32 %v147, %v154
    %v159 = vadd.f32 %v148, %v154
    %v160 = vld [vmem:[%s3] sm:$0xf]
    %v161 = vld [vmem:[%s3 + $0x4] sm:$0xf]
    %v162 = vld [vmem:[%s3 + $0x8] sm:$0xf]
    %v163 = vld [vmem:[%s3 + $0xc] sm:$0xf]
    %v164 = vunpack.c.l.bf16 %v160
    %v165 = vunpack.c.l.bf16 %v161
    %v166 = vunpack.c.l.bf16 %v162
    %v167 = vunpack.c.l.bf16 %v163
    %v168 = vadd.f32 %v156, %v164
    %v169 = vadd.f32 %v157, %v165
    %v170 = vadd.f32 %v158, %v166
    %v171 = vadd.f32 %v159, %v167
    %v172 = vpack.c.bf16 %v169, %v168
    %v173 = vpack.c.bf16 %v171, %v170
    %v176 = vunpack.c.l.b16 %v172
    %v177 = vunpack.c.h.b16 %v172
    %v178 = vunpack.c.l.b16 %v173
    %v179 = vunpack.c.h.b16 %v173
    %v180 = vpack.c.b16 %v176, %v176
    %v181 = vpack.c.b16 %v177, %v177
    %v182 = vpack.c.b16 %v178, %v178
    %v183 = vpack.c.b16 %v179, %v179
    %vm188 = vcmask 257024
    %189 = vst.msk [vmem:[%s4] sm:$0xf] %vm188, %v180
    %190 = vst.msk [vmem:[%s4 + $0x4] sm:$0xf] %vm188, %v181
    %191 = vst.msk [vmem:[%s4 + $0x8] sm:$0xf] %vm188, %v182
    %192 = vst.msk [vmem:[%s4 + $0xc] sm:$0xf] %vm188, %v183
  $region25: #{_lambda_.17} parent=0 // pred_fallthru
    _
  // Predicated region
  $region26: #{_lambda_.17} parent=0 // pred_check
    _
  $region27: #{_lambda_.17} parent=0 // pred_check_branch
    %194 = sbr.rel (0) target = $region29
  $region28: #{_lambda_.17} parent=0 // pred_region
    _
  $region29: #{_lambda_.17} parent=0 // pred_fallthru
    _
  // Predicated region
  $region30: #{_lambda_.17} parent=0 // pred_check
    _
  $region31: #{_lambda_.17} parent=0 // pred_check_branch
    %196 = sbr.rel (0) target = $region33
  $region32: #{_lambda_.17} parent=0 // pred_region
    _
  $region33: #{_lambda_.17} parent=0 // pred_fallthru
    _

// kernel: _lambda_.15
$region0: #{_lambda_.15}
  #allocation0 [shape = 'u32[]', space=smem, size = 0x4, offset = 0x4, fixed_abs, tag = 'smem constant byte address 0x4 - core index']
  #allocation1 [shape = 'u32[144,128]{1,0:T(1,128)}', space=vmem, size = 0x12000, scoped, tag = 'internal scratch']
  #allocation2 [shape = 'f32[32,32]{1,0:T(8,128)}', space=vmem, size = 0x4000, scoped, tag = 'scratch operand']
  %s0 = inlined_call_operand.vmem [shape: bf16[32,32], index: 0, kind: input, shape index: {}]
  %s1 = inlined_call_operand.vmem [shape: bf16[32,32], index: 1, kind: input, shape index: {}]
  %s2 = inlined_call_operand.vmem [shape: f32[1,32], index: 2, kind: input, shape index: {}]
  %s3 = inlined_call_operand.vmem [shape: bf16[32,32], index: 3, kind: input, shape index: {}]
  %s4 = inlined_call_operand.vmem [shape: bf16[32,32], index: 4, kind: output, shape index: {}]
  %s5 = sld [smem:[#allocation0]]
  $region34: #{_lambda_.15} parent=0
    _
  %s7 = ssub.s32 1, %s5
  %s8 = scalar_select 0, %s7, %s5
  // Predicated region
  $region2: #{_lambda_.15} parent=0 // pred_check
    _
  $region3: #{_lambda_.15} parent=0 // pred_check_branch
    %10 = sbr.rel (0) target = $region5
  $region4: #{_lambda_.15} parent=0 // pred_region
    _
  $region5: #{_lambda_.15} parent=0 // pred_fallthru
    _
  // Predicated region
  $region6: #{_lambda_.15} parent=0 // pred_check
    _
  $region7: #{_lambda_.15} parent=0 // pred_check_branch
    %12 = sbr.rel (0) target = $region9
  $region8: #{_lambda_.15} parent=0 // pred_region
    _
  $region9: #{_lambda_.15} parent=0 // pred_fallthru
    _
  // Predicated region
  $region10: #{_lambda_.15} parent=0 // pred_check
    _
  $region11: #{_lambda_.15} parent=0 // pred_check_branch
    %14 = sbr.rel (0) target = $region13
  $region12: #{_lambda_.15} parent=0 // pred_region
    _
  $region13: #{_lambda_.15} parent=0 // pred_fallthru
    _
  // Predicated region
  $region14: #{_lambda_.15} parent=0 // pred_check
    _
  $region15: #{_lambda_.15} parent=0 // pred_check_branch
    %16 = sbr.rel (0) target = $region17
  $region16: #{_lambda_.15} parent=0 // pred_region
    _
  $region17: #{_lambda_.15} parent=0 // pred_fallthru
    _
  %p18 = scmp.eq.s32.totalorder 0, 0
  // Predicated region
  $region18: #{_lambda_.15} parent=0 // pred_check
    %p19 = pneg %p18
  $region19: #{_lambda_.15} parent=0 // pred_check_branch
    %21 = sbr.rel (%p19) target = $region21
  $region20: #{_lambda_.15} parent=0 // pred_region
    %vm22 = vcmask 261120
    %23 = vst.msk [vmem:[#allocation2] sm:$0xff] %vm22, 0.0
    %24 = vst.msk [vmem:[#allocation2 + $0x8] sm:$0xff] %vm22, 0.0
    %25 = vst.msk [vmem:[#allocation2 + $0x10] sm:$0xff] %vm22, 0.0
    %26 = vst.msk [vmem:[#allocation2 + $0x18] sm:$0xff] %vm22, 0.0
  $region21: #{_lambda_.15} parent=0 // pred_fallthru
    _
  %v27 = vld [vmem:[#allocation2] sm:$0xff]
  %v28 = vld [vmem:[#allocation2 + $0x8] sm:$0xff]
  %v29 = vld [vmem:[#allocation2 + $0x10] sm:$0xff]
  %v30 = vld [vmem:[#allocation2 + $0x18] sm:$0xff]
  %v31 = vld [vmem:[%s0] sm:$0xf]
  %v32 = vld [vmem:[%s0 + $0x4] sm:$0xf]
  %v33 = vld [vmem:[%s0 + $0x8] sm:$0xf]
  %v34 = vld [vmem:[%s0 + $0xc] sm:$0xf]
  %v35 = vld [vmem:[%s1] sm:$0xf]
  %v36 = vld [vmem:[%s1 + $0x4] sm:$0xf]
  %v37 = vld [vmem:[%s1 + $0x8] sm:$0xf]
  %v38 = vld [vmem:[%s1 + $0xc] sm:$0xf]
  %v43 = vunpack.c.l.b16 %v31
  %v44 = vunpack.c.l.b16 %v32
  %v45 = vunpack.c.l.b16 %v33
  %v46 = vunpack.c.l.b16 %v34
  %v47 = vpack.c.b16 %v44, %v43
  %v48 = vpack.c.b16 %v46, %v45
  %v53 = vunpack.c.l.b16 %v35
  %v54 = vunpack.c.l.b16 %v36
  %v55 = vunpack.c.l.b16 %v37
  %v56 = vunpack.c.l.b16 %v38
  %v57 = vpack.c.b16 %v54, %v53
  %v58 = vpack.c.b16 %v56, %v55
  %vm61 = vcmask 261120
  %v63 = vsel %vm61, %v47, 0
  %v66 = vsel %vm61, %v48, 0
  %68 = vmatprep.subr.bf16.mxu0 0
  %69 = vmatpush1.bf16.msra.mxu0 %v57
  %70 = vmatprep.subr.bf16.mxu0 0
  %71 = vmatpush1.bf16.msra.mxu0 %v58
  %72 = vmatprep.subr.bf16.mxu0 0
  %73 = vmatpush1.bf16.msra.mxu0 0
  %74 = vmatprep.subr.bf16.mxu0 0
  %75 = vmatpush1.bf16.msra.mxu0 0
  %76 = vmatprep.subr.bf16.mxu0 0
  %77 = vmatpush1.bf16.msra.mxu0 0
  %78 = vmatprep.subr.bf16.mxu0 0
  %79 = vmatpush1.bf16.msra.mxu0 0
  %80 = vmatprep.subr.bf16.mxu0 0
  %81 = vmatpush1.bf16.msra.mxu0 0
  %82 = vmatprep.subr.bf16.mxu0 0
  %83 = vmatpush1.bf16.msra.mxu0 0
  %84 = vmatprep.subr.bf16.mxu0 0
  %85 = vmatpush1.bf16.msra.mxu0 0
  %86 = vmatprep.subr.bf16.mxu0 0
  %87 = vmatpush1.bf16.msra.mxu0 0
  %88 = vmatprep.subr.bf16.mxu0 0
  %89 = vmatpush1.bf16.msra.mxu0 0
  %90 = vmatprep.subr.bf16.mxu0 0
  %91 = vmatpush1.bf16.msra.mxu0 0
  %92 = vmatprep.subr.bf16.mxu0 0
  %93 = vmatpush1.bf16.msra.mxu0 0
  %94 = vmatprep.subr.bf16.mxu0 0
  %95 = vmatpush1.bf16.msra.mxu0 0
  %96 = vmatprep.subr.bf16.mxu0 0
  %97 = vmatpush1.bf16.msra.mxu0 0
  %98 = vmatprep.subr.bf16.mxu0 0
  %99 = vmatpush1.bf16.msra.mxu0 0
  %100 = vmatprep.mubr.bf16.mxu0 0
  %101 = vmatmul.mubr.bf16.gmra.mrb[0].mxu0 %v63
  %v102 = vpop.f32.mrb[0].mxu0
  %v103 = vadd.f32 0.0, %v102
  %v104 = vpop.f32.mrb[0].mxu0
  %v105 = vpop.f32.mrb[0].mxu0
  %v106 = vadd.f32 0.0, %v105
  %v107 = vpop.f32.mrb[0].mxu0
  %108 = vmatprep.mubr.bf16.mxu0 0
  %109 = vmatmul.mubr.bf16.gmra.mrb[0].mxu0 %v66
  %v110 = vpop.f32.mrb[0].mxu0
  %v111 = vadd.f32 0.0, %v110
  %v112 = vpop.f32.mrb[0].mxu0
  %v113 = vpop.f32.mrb[0].mxu0
  %v114 = vadd.f32 0.0, %v113
  %v115 = vpop.f32.mrb[0].mxu0
  %116 = vdwg.mxu0
  %v117 = vadd.f32 %v27, %v103
  %v118 = vadd.f32 %v28, %v106
  %v119 = vadd.f32 %v29, %v111
  %v120 = vadd.f32 %v30, %v114
  %121 = vst.msk [vmem:[#allocation2] sm:$0xff] %vm61, %v117
  %122 = vst.msk [vmem:[#allocation2 + $0x8] sm:$0xff] %vm61, %v118
  %123 = vst.msk [vmem:[#allocation2 + $0x10] sm:$0xff] %vm61, %v119
  %124 = vst.msk [vmem:[#allocation2 + $0x18] sm:$0xff] %vm61, %v120
  // Predicated region
  $region22: #{_lambda_.15} parent=0 // pred_check
    %p125 = pneg %p18
  $region23: #{_lambda_.15} parent=0 // pred_check_branch
    %127 = sbr.rel (%p125) target = $region25
  $region24: #{_lambda_.15} parent=0 // pred_region
    %v128 = vld [vmem:[#allocation2] sm:$0xff]
    %v129 = vld [vmem:[#allocation2 + $0x8] sm:$0xff]
    %v130 = vld [vmem:[#allocation2 + $0x10] sm:$0xff]
    %v131 = vld [vmem:[#allocation2 + $0x18] sm:$0xff]
    %v132 = vld [vmem:[%s2] sm:$0x1]
    %v134 = vlaneseq
    %v135 = vshrl.u32 %v134, 7
    %v136 = vsub.s32 0, %v135
    %v137 = vrot.slane %v132, %v136
    %v139 = vadd.f32 %v128, %v137
    %v140 = vadd.f32 %v129, %v137
    %v141 = vadd.f32 %v130, %v137
    %v142 = vadd.f32 %v131, %v137
    %v143 = vld [vmem:[%s3] sm:$0xf]
    %v144 = vld [vmem:[%s3 + $0x4] sm:$0xf]
    %v145 = vld [vmem:[%s3 + $0x8] sm:$0xf]
    %v146 = vld [vmem:[%s3 + $0xc] sm:$0xf]
    %v147 = vunpack.c.l.bf16 %v143
    %v148 = vunpack.c.l.bf16 %v144
    %v149 = vunpack.c.l.bf16 %v145
    %v150 = vunpack.c.l.bf16 %v146
    %v151 = vadd.f32 %v139, %v147
    %v152 = vadd.f32 %v140, %v148
    %v153 = vadd.f32 %v141, %v149
    %v154 = vadd.f32 %v142, %v150
    %v155 = vpack.c.bf16 %v152, %v151
    %v156 = vpack.c.bf16 %v154, %v153
    %v159 = vunpack.c.l.b16 %v155
    %v160 = vunpack.c.h.b16 %v155
    %v161 = vunpack.c.l.b16 %v156
    %v162 = vunpack.c.h.b16 %v156
    %v163 = vpack.c.b16 %v159, %v159
    %v164 = vpack.c.b16 %v160, %v160
    %v165 = vpack.c.b16 %v161, %v161
    %v166 = vpack.c.b16 %v162, %v162
    %vm171 = vcmask 257024
    %172 = vst.msk [vmem:[%s4] sm:$0xf] %vm171, %v163
    %173 = vst.msk [vmem:[%s4 + $0x4] sm:$0xf] %vm171, %v164
    %174 = vst.msk [vmem:[%s4 + $0x8] sm:$0xf] %vm171, %v165
    %175 = vst.msk [vmem:[%s4 + $0xc] sm:$0xf] %vm171, %v166
  $region25: #{_lambda_.15} parent=0 // pred_fallthru
    _
  // Predicated region
  $region26: #{_lambda_.15} parent=0 // pred_check
    _
  $region27: #{_lambda_.15} parent=0 // pred_check_branch
    %177 = sbr.rel (0) target = $region29
  $region28: #{_lambda_.15} parent=0 // pred_region
    _
  $region29: #{_lambda_.15} parent=0 // pred_fallthru
    _
  // Predicated region
  $region30: #{_lambda_.15} parent=0 // pred_check
    _
  $region31: #{_lambda_.15} parent=0 // pred_check_branch
    %179 = sbr.rel (0) target = $region33
  $region32: #{_lambda_.15} parent=0 // pred_region
    _
  $region33: #{_lambda_.15} parent=0 // pred_fallthru
    _

// kernel: _lambda_.16
$region0: #{_lambda_.16}
  #allocation0 [shape = 'u32[]', space=smem, size = 0x4, offset = 0x4, fixed_abs, tag = 'smem constant byte address 0x4 - core index']
  #allocation1 [shape = 'u32[144,128]{1,0:T(1,128)}', space=vmem, size = 0x12000, scoped, tag = 'internal scratch']
  #allocation2 [shape = 'bf16[32,32]{1,0:T(16,128)(2,1)}', space=vmem, size = 0x2000, scoped, tag = 'scratch operand']
  %s0 = inlined_call_operand.vmem [shape: bf16[32,32], index: 0, kind: input, shape index: {}]
  %s1 = inlined_call_operand.vmem [shape: f32[1,32], index: 1, kind: input, shape index: {}]
  %s2 = inlined_call_operand.vmem [shape: f32[1,32], index: 2, kind: input, shape index: {}]
  %s3 = inlined_call_operand.vmem [shape: bf16[32,64], index: 3, kind: input, shape index: {}]
  %s4 = inlined_call_operand.vmem [shape: f32[1,64], index: 4, kind: input, shape index: {}]
  %s5 = inlined_call_operand.vmem [shape: bf16[32,64], index: 5, kind: output, shape index: {}]
  %s6 = sld [smem:[#allocation0]]
  $region34: #{_lambda_.16} parent=0
    _
  %s8 = ssub.s32 1, %s6
  %s9 = scalar_select 0, %s8, %s6
  // Predicated region
  $region2: #{_lambda_.16} parent=0 // pred_check
    _
  $region3: #{_lambda_.16} parent=0 // pred_check_branch
    %11 = sbr.rel (0) target = $region5
  $region4: #{_lambda_.16} parent=0 // pred_region
    _
  $region5: #{_lambda_.16} parent=0 // pred_fallthru
    _
  // Predicated region
  $region6: #{_lambda_.16} parent=0 // pred_check
    _
  $region7: #{_lambda_.16} parent=0 // pred_check_branch
    %13 = sbr.rel (0) target = $region9
  $region8: #{_lambda_.16} parent=0 // pred_region
    _
  $region9: #{_lambda_.16} parent=0 // pred_fallthru
    _
  // Predicated region
  $region10: #{_lambda_.16} parent=0 // pred_check
    _
  $region11: #{_lambda_.16} parent=0 // pred_check_branch
    %15 = sbr.rel (0) target = $region13
  $region12: #{_lambda_.16} parent=0 // pred_region
    _
  $region13: #{_lambda_.16} parent=0 // pred_fallthru
    _
  // Predicated region
  $region14: #{_lambda_.16} parent=0 // pred_check
    _
  $region15: #{_lambda_.16} parent=0 // pred_check_branch
    %17 = sbr.rel (0) target = $region17
  $region16: #{_lambda_.16} parent=0 // pred_region
    _
  $region17: #{_lambda_.16} parent=0 // pred_fallthru
    _
  // Predicated region
  $region18: #{_lambda_.16} parent=0 // pred_check
    _
  $region19: #{_lambda_.16} parent=0 // pred_check_branch
    %19 = sbr.rel (0) target = $region21
  $region20: #{_lambda_.16} parent=0 // pred_region
    _
  $region21: #{_lambda_.16} parent=0 // pred_fallthru
    _
  %p21 = scmp.eq.s32.totalorder 0, 0
  // Predicated region
  $region22: #{_lambda_.16} parent=0 // pred_check
    %p22 = pneg %p21
  $region23: #{_lambda_.16} parent=0 // pred_check_branch
    %24 = sbr.rel (%p22) target = $region25
  $region24: #{_lambda_.16} parent=0 // pred_region
    %v25 = vld [vmem:[%s0] sm:$0xf]
    %v26 = vld [vmem:[%s0 + $0x4] sm:$0xf]
    %v27 = vld [vmem:[%s0 + $0x8] sm:$0xf]
    %v28 = vld [vmem:[%s0 + $0xc] sm:$0xf]
    %v29 = vunpack.c.l.bf16 %v25
    %v30 = vunpack.c.l.bf16 %v26
    %v31 = vunpack.c.l.bf16 %v27
    %v32 = vunpack.c.l.bf16 %v28
    %vm33 = vcmask 261120
    %v34 = vsel %vm33, %v29, 0.0
    %35 = vadd.xlane.f32.xlu0 %v34
    %v36 = vpop.xlane.xlu0 %35
    %v37 = vsel %vm33, %v30, 0.0
    %38 = vadd.xlane.f32.xlu0 %v37
    %v39 = vpop.xlane.xlu0 %38
    %v40 = vsel %vm33, %v31, 0.0
    %41 = vadd.xlane.f32.xlu0 %v40
    %v42 = vpop.xlane.xlu0 %41
    %v43 = vsel %vm33, %v32, 0.0
    %44 = vadd.xlane.f32.xlu0 %v43
    %v45 = vpop.xlane.xlu0 %44
    %v46 = vrcp.pop 32.0
    %v47 = vmul.f32 %v36, %v46
    %v48 = vmul.f32 %v39, %v46
    %v49 = vmul.f32 %v42, %v46
    %v50 = vmul.f32 %v45, %v46
    %v51 = vsub.f32 %v29, %v47
    %v52 = vsub.f32 %v30, %v48
    %v53 = vsub.f32 %v31, %v49
    %v54 = vsub.f32 %v32, %v50
    %v55 = vmul.f32 %v51, %v51
    %v56 = vmul.f32 %v52, %v52
    %v57 = vmul.f32 %v53, %v53
    %v58 = vmul.f32 %v54, %v54
    %v59 = vsel %vm33, %v55, 0.0
    %60 = vadd.xlane.f32.xlu0 %v59
    %v61 = vpop.xlane.xlu0 %60
    %v62 = vsel %vm33, %v56, 0.0
    %63 = vadd.xlane.f32.xlu0 %v62
    %v64 = vpop.xlane.xlu0 %63
    %v65 = vsel %vm33, %v57, 0.0
    %66 = vadd.xlane.f32.xlu0 %v65
    %v67 = vpop.xlane.xlu0 %66
    %v68 = vsel %vm33, %v58, 0.0
    %69 = vadd.xlane.f32.xlu0 %v68
    %v70 = vpop.xlane.xlu0 %69
    %v71 = vmul.f32 %v61, %v46
    %v72 = vmul.f32 %v64, %v46
    %v73 = vmul.f32 %v67, %v46
    %v74 = vmul.f32 %v70, %v46
    %v75 = vadd.f32 %v71, 1e-12
    %v76 = vadd.f32 %v72, 1e-12
    %v77 = vadd.f32 %v73, 1e-12
    %v78 = vadd.f32 %v74, 1e-12
    %v79 = vrsqrt.pop %v75
    %v80 = vrsqrt.pop %v76
    %v81 = vrsqrt.pop %v77
    %v82 = vrsqrt.pop %v78
    %v83 = vmul.f32 %v51, %v79
    %v84 = vmul.f32 %v52, %v80
    %v85 = vmul.f32 %v53, %v81
    %v86 = vmul.f32 %v54, %v82
    %v87 = vld [vmem:[%s1] sm:$0x1]
    %v89 = vlaneseq
    %v90 = vshrl.u32 %v89, 7
    %v91 = vsub.s32 0, %v90
    %v92 = vrot.slane %v87, %v91
    %v94 = vmul.f32 %v83, %v92
    %v95 = vmul.f32 %v84, %v92
    %v96 = vmul.f32 %v85, %v92
    %v97 = vmul.f32 %v86, %v92
    %v98 = vld [vmem:[%s2] sm:$0x1]
    %v100 = vlaneseq
    %v101 = vshrl.u32 %v100, 7
    %v102 = vsub.s32 0, %v101
    %v103 = vrot.slane %v98, %v102
    %v105 = vadd.f32 %v94, %v103
    %v106 = vadd.f32 %v95, %v103
    %v107 = vadd.f32 %v96, %v103
    %v108 = vadd.f32 %v97, %v103
    %v109 = vpack.c.bf16 %v106, %v105
    %v110 = vpack.c.bf16 %v108, %v107
    %111 = vst.msk [vmem:[#allocation2] sm:$0xff] %vm33, %v109
    %112 = vst.msk [vmem:[#allocation2 + $0x8] sm:$0xff] %vm33, %v110
  $region25: #{_lambda_.16} parent=0 // pred_fallthru
    _
  %v113 = vld [vmem:[#allocation2] sm:$0xff]
  %v114 = vld [vmem:[#allocation2 + $0x8] sm:$0xff]
  %v115 = vld [vmem:[%s3] sm:$0xf]
  %v116 = vld [vmem:[%s3 + $0x4] sm:$0xf]
  %v117 = vld [vmem:[%s3 + $0x8] sm:$0xf]
  %v118 = vld [vmem:[%s3 + $0xc] sm:$0xf]
  %v119 = vld [vmem:[%s4] sm:$0x1]
  %v121 = vlaneseq
  %v122 = vshrl.u32 %v121, 7
  %v123 = vsub.s32 0, %v122
  %v124 = vrot.slane %v119, %v123
  %v130 = vunpack.c.l.b16 %v115
  %v131 = vunpack.c.l.b16 %v116
  %v132 = vunpack.c.l.b16 %v117
  %v133 = vunpack.c.l.b16 %v118
  %v134 = vpack.c.b16 %v131, %v130
  %v135 = vpack.c.b16 %v133, %v132
  %vm138 = vcmask 261120
  %v140 = vsel %vm138, %v113, 0
  %v143 = vsel %vm138, %v114, 0
  %145 = vmatprep.subr.bf16.mxu0 0
  %146 = vmatpush1.bf16.msra.mxu0 %v134
  %147 = vmatprep.subr.bf16.mxu0 0
  %148 = vmatpush1.bf16.msra.mxu0 %v135
  %149 = vmatprep.subr.bf16.mxu0 0
  %150 = vmatpush1.bf16.msra.mxu0 0
  %151 = vmatprep.subr.bf16.mxu0 0
  %152 = vmatpush1.bf16.msra.mxu0 0
  %153 = vmatprep.subr.bf16.mxu0 0
  %154 = vmatpush1.bf16.msra.mxu0 0
  %155 = vmatprep.subr.bf16.mxu0 0
  %156 = vmatpush1.bf16.msra.mxu0 0
  %157 = vmatprep.subr.bf16.mxu0 0
  %158 = vmatpush1.bf16.msra.mxu0 0
  %159 = vmatprep.subr.bf16.mxu0 0
  %160 = vmatpush1.bf16.msra.mxu0 0
  %161 = vmatprep.subr.bf16.mxu0 0
  %162 = vmatpush1.bf16.msra.mxu0 0
  %163 = vmatprep.subr.bf16.mxu0 0
  %164 = vmatpush1.bf16.msra.mxu0 0
  %165 = vmatprep.subr.bf16.mxu0 0
  %166 = vmatpush1.bf16.msra.mxu0 0
  %167 = vmatprep.subr.bf16.mxu0 0
  %168 = vmatpush1.bf16.msra.mxu0 0
  %169 = vmatprep.subr.bf16.mxu0 0
  %170 = vmatpush1.bf16.msra.mxu0 0
  %171 = vmatprep.subr.bf16.mxu0 0
  %172 = vmatpush1.bf16.msra.mxu0 0
  %173 = vmatprep.subr.bf16.mxu0 0
  %174 = vmatpush1.bf16.msra.mxu0 0
  %175 = vmatprep.subr.bf16.mxu0 0
  %176 = vmatpush1.bf16.msra.mxu0 0
  %177 = vmatprep.mubr.bf16.mxu0 0
  %178 = vmatmul.mubr.bf16.gmra.mrb[0].mxu0 %v140
  %v179 = vpop.f32.mrb[0].mxu0
  %v180 = vadd.f32 %v124, %v179
  %v181 = vpop.f32.mrb[0].mxu0
  %v182 = vpop.f32.mrb[0].mxu0
  %v183 = vadd.f32 %v124, %v182
  %v184 = vpop.f32.mrb[0].mxu0
  %185 = vmatprep.mubr.bf16.mxu0 0
  %186 = vmatmul.mubr.bf16.gmra.mrb[0].mxu0 %v143
  %v187 = vpop.f32.mrb[0].mxu0
  %v188 = vadd.f32 %v124, %v187
  %v189 = vpop.f32.mrb[0].mxu0
  %v190 = vpop.f32.mrb[0].mxu0
  %v191 = vadd.f32 %v124, %v190
  %v192 = vpop.f32.mrb[0].mxu0
  %193 = vdwg.mxu0
  %v194 = vmul.f32 %v180, 0.5
  %v195 = vmul.f32 %v183, 0.5
  %v196 = vmul.f32 %v188, 0.5
  %v197 = vmul.f32 %v191, 0.5
  %v198 = vmul.f32 %v180, 0.70710677
  %v199 = vmul.f32 %v183, 0.70710677
  %v200 = vmul.f32 %v188, 0.70710677
  %v201 = vmul.f32 %v191, 0.70710677
  %vm202 = vcmp.ge.f32.partialorder %v198, 0.0
  %vm203 = vcmp.ge.f32.partialorder %v199, 0.0
  %vm204 = vcmp.ge.f32.partialorder %v200, 0.0
  %vm205 = vcmp.ge.f32.partialorder %v201, 0.0
  %v206 = vsel %vm202, 1.0, -1.0
  %v207 = vsel %vm203, 1.0, -1.0
  %v208 = vsel %vm204, 1.0, -1.0
  %v209 = vsel %vm205, 1.0, -1.0
  %v210 = vand.u32 2147483647, %v198
  %v211 = vand.u32 2147483647, %v199
  %v212 = vand.u32 2147483647, %v200
  %v213 = vand.u32 2147483647, %v201
  %v214 = vmul.f32 %v210, 0.3275911
  %v215 = vmul.f32 %v211, 0.3275911
  %v216 = vmul.f32 %v212, 0.3275911
  %v217 = vmul.f32 %v213, 0.3275911
  %v218 = vadd.f32 %v214, 1.0
  %v219 = vadd.f32 %v215, 1.0
  %v220 = vadd.f32 %v216, 1.0
  %v221 = vadd.f32 %v217, 1.0
  %v222 = vrcp.pop %v218
  %v223 = vmul.f32 1.0, %v222
  %v224 = vrcp.pop %v219
  %v225 = vmul.f32 1.0, %v224
  %v226 = vrcp.pop %v220
  %v227 = vmul.f32 1.0, %v226
  %v228 = vrcp.pop %v221
  %v229 = vmul.f32 1.0, %v228
  %v230 = vmul.f32 %v223, 1.0614054
  %v231 = vmul.f32 %v225, 1.0614054
  %v232 = vmul.f32 %v227, 1.0614054
  %v233 = vmul.f32 %v229, 1.0614054
  %v234 = vadd.f32 %v230, -1.4531521
  %v235 = vadd.f32 %v231, -1.4531521
  %v236 = vadd.f32 %v232, -1.4531521
  %v237 = vadd.f32 %v233, -1.4531521
  %v238 = vmul.f32 %v234, %v223
  %v239 = vmul.f32 %v235, %v225
  %v240 = vmul.f32 %v236, %v227
  %v241 = vmul.f32 %v237, %v229
  %v242 = vadd.f32 %v238, 1.4214138
  %v243 = vadd.f32 %v239, 1.4214138
  %v244 = vadd.f32 %v240, 1.4214138
  %v245 = vadd.f32 %v241, 1.4214138
  %v246 = vmul.f32 %v242, %v223
  %v247 = vmul.f32 %v243, %v225
  %v248 = vmul.f32 %v244, %v227
  %v249 = vmul.f32 %v245, %v229
  %v250 = vadd.f32 %v246, -0.28449672
  %v251 = vadd.f32 %v247, -0.28449672
  %v252 = vadd.f32 %v248, -0.28449672
  %v253 = vadd.f32 %v249, -0.28449672
  %v254 = vmul.f32 %v250, %v223
  %v255 = vmul.f32 %v251, %v225
  %v256 = vmul.f32 %v252, %v227
  %v257 = vmul.f32 %v253, %v229
  %v258 = vadd.f32 %v254, 0.2548296
  %v259 = vadd.f32 %v255, 0.2548296
  %v260 = vadd.f32 %v256, 0.2548296
  %v261 = vadd.f32 %v257, 0.2548296
  %v262 = vmul.f32 %v258, %v223
  %v263 = vmul.f32 %v259, %v225
  %v264 = vmul.f32 %v260, %v227
  %v265 = vmul.f32 %v261, %v229
  %v266 = vsub.f32 0.0, %v210
  %v267 = vsub.f32 0.0, %v211
  %v268 = vsub.f32 0.0, %v212
  %v269 = vsub.f32 0.0, %v213
  %v270 = vmul.f32 %v266, %v210
  %v271 = vmul.f32 %v267, %v211
  %v272 = vmul.f32 %v268, %v212
  %v273 = vmul.f32 %v269, %v213
  %v274 = vmul.f32 %v270, 1.442695
  %v275 = vpow.pop %v274
  %v276 = vmul.f32 %v271, 1.442695
  %v277 = vpow.pop %v276
  %v278 = vmul.f32 %v272, 1.442695
  %v279 = vpow.pop %v278
  %v280 = vmul.f32 %v273, 1.442695
  %v281 = vpow.pop %v280
  %v282 = vmul.f32 %v262, %v275
  %v283 = vmul.f32 %v263, %v277
  %v284 = vmul.f32 %v264, %v279
  %v285 = vmul.f32 %v265, %v281
  %v286 = vsub.f32 1.0, %v282
  %v287 = vsub.f32 1.0, %v283
  %v288 = vsub.f32 1.0, %v284
  %v289 = vsub.f32 1.0, %v285
  %v290 = vmul.f32 %v206, %v286
  %v291 = vmul.f32 %v207, %v287
  %v292 = vmul.f32 %v208, %v288
  %v293 = vmul.f32 %v209, %v289
  %v294 = vadd.f32 %v290, 1.0
  %v295 = vadd.f32 %v291, 1.0
  %v296 = vadd.f32 %v292, 1.0
  %v297 = vadd.f32 %v293, 1.0
  %v298 = vmul.f32 %v194, %v294
  %v299 = vmul.f32 %v195, %v295
  %v300 = vmul.f32 %v196, %v296
  %v301 = vmul.f32 %v197, %v297
  %v302 = vpack.c.bf16 %v299, %v298
  %v303 = vpack.c.bf16 %v301, %v300
  %v306 = vunpack.c.l.b16 %v302
  %v307 = vunpack.c.h.b16 %v302
  %v308 = vunpack.c.l.b16 %v303
  %v309 = vunpack.c.h.b16 %v303
  %v310 = vpack.c.b16 %v306, %v306
  %v311 = vpack.c.b16 %v307, %v307
  %v312 = vpack.c.b16 %v308, %v308
  %v313 = vpack.c.b16 %v309, %v309
  %vm318 = vcmask 519168
  %319 = vst.msk [vmem:[%s5] sm:$0xf] %vm318, %v310
  %320 = vst.msk [vmem:[%s5 + $0x4] sm:$0xf] %vm318, %v311
  %321 = vst.msk [vmem:[%s5 + $0x8] sm:$0xf] %vm318, %v312
  %322 = vst.msk [vmem:[%s5 + $0xc] sm:$0xf] %vm318, %v313
  // Predicated region
  $region26: #{_lambda_.16} parent=0 // pred_check
    _
  $region27: #{_lambda_.16} parent=0 // pred_check_branch
    %324 = sbr.rel (0) target = $region29
  $region28: #{_lambda_.16} parent=0 // pred_region
    _
  $region29: #{_lambda_.16} parent=0 // pred_fallthru
    _
  // Predicated region
  $region30: #{_lambda_.16} parent=0 // pred_check
    _
  $region31: #{_lambda_.16} parent=0 // pred_check_branch
    %326 = sbr.rel (0) target = $region33
  $region32: #{_lambda_.16} parent=0 // pred_region
    _
  $region33: #{_lambda_.16} parent=0 // pred_fallthru
    _

// kernel: _lambda_.23
$region0: #{_lambda_.23}
  #allocation0 [shape = 'u32[]', space=smem, size = 0x4, offset = 0x4, fixed_abs, tag = 'smem constant byte address 0x4 - core index']
  #allocation1 [shape = 'u32[144,128]{1,0:T(1,128)}', space=vmem, size = 0x12000, scoped, tag = 'internal scratch']
  %s0 = inlined_call_operand.vmem [shape: bf16[32,32], index: 0, kind: input, shape index: {}]
  %s1 = inlined_call_operand.vmem [shape: f32[1,32], index: 1, kind: input, shape index: {}]
  %s2 = inlined_call_operand.vmem [shape: f32[1,32], index: 2, kind: input, shape index: {}]
  %s3 = inlined_call_operand.vmem [shape: f32[32,32], index: 3, kind: output, shape index: {}]
  %s4 = sld [smem:[#allocation0]]
  $region22: #{_lambda_.23} parent=0
    _
  %s6 = ssub.s32 1, %s4
  %s7 = scalar_select 0, %s6, %s4
  // Predicated region
  $region2: #{_lambda_.23} parent=0 // pred_check
    _
  $region3: #{_lambda_.23} parent=0 // pred_check_branch
    %9 = sbr.rel (0) target = $region5
  $region4: #{_lambda_.23} parent=0 // pred_region
    _
  $region5: #{_lambda_.23} parent=0 // pred_fallthru
    _
  // Predicated region
  $region6: #{_lambda_.23} parent=0 // pred_check
    _
  $region7: #{_lambda_.23} parent=0 // pred_check_branch
    %11 = sbr.rel (0) target = $region9
  $region8: #{_lambda_.23} parent=0 // pred_region
    _
  $region9: #{_lambda_.23} parent=0 // pred_fallthru
    _
  // Predicated region
  $region10: #{_lambda_.23} parent=0 // pred_check
    _
  $region11: #{_lambda_.23} parent=0 // pred_check_branch
    %13 = sbr.rel (0) target = $region13
  $region12: #{_lambda_.23} parent=0 // pred_region
    _
  $region13: #{_lambda_.23} parent=0 // pred_fallthru
    _
  %v14 = vld [vmem:[%s0] sm:$0xf]
  %v15 = vld [vmem:[%s0 + $0x4] sm:$0xf]
  %v16 = vld [vmem:[%s0 + $0x8] sm:$0xf]
  %v17 = vld [vmem:[%s0 + $0xc] sm:$0xf]
  %v18 = vunpack.c.l.bf16 %v14
  %v19 = vunpack.c.l.bf16 %v15
  %v20 = vunpack.c.l.bf16 %v16
  %v21 = vunpack.c.l.bf16 %v17
  %vm22 = vcmask 261120
  %v23 = vsel %vm22, %v18, 0.0
  %24 = vadd.xlane.f32.xlu0 %v23
  %v25 = vpop.xlane.xlu0 %24
  %v26 = vsel %vm22, %v19, 0.0
  %27 = vadd.xlane.f32.xlu0 %v26
  %v28 = vpop.xlane.xlu0 %27
  %v29 = vsel %vm22, %v20, 0.0
  %30 = vadd.xlane.f32.xlu0 %v29
  %v31 = vpop.xlane.xlu0 %30
  %v32 = vsel %vm22, %v21, 0.0
  %33 = vadd.xlane.f32.xlu0 %v32
  %v34 = vpop.xlane.xlu0 %33
  %v35 = vrcp.pop 32.0
  %v36 = vmul.f32 %v25, %v35
  %v37 = vmul.f32 %v28, %v35
  %v38 = vmul.f32 %v31, %v35
  %v39 = vmul.f32 %v34, %v35
  %v40 = vsub.f32 %v18, %v36
  %v41 = vsub.f32 %v19, %v37
  %v42 = vsub.f32 %v20, %v38
  %v43 = vsub.f32 %v21, %v39
  %v44 = vmul.f32 %v40, %v40
  %v45 = vmul.f32 %v41, %v41
  %v46 = vmul.f32 %v42, %v42
  %v47 = vmul.f32 %v43, %v43
  %v48 = vsel %vm22, %v44, 0.0
  %49 = vadd.xlane.f32.xlu0 %v48
  %v50 = vpop.xlane.xlu0 %49
  %v51 = vsel %vm22, %v45, 0.0
  %52 = vadd.xlane.f32.xlu0 %v51
  %v53 = vpop.xlane.xlu0 %52
  %v54 = vsel %vm22, %v46, 0.0
  %55 = vadd.xlane.f32.xlu0 %v54
  %v56 = vpop.xlane.xlu0 %55
  %v57 = vsel %vm22, %v47, 0.0
  %58 = vadd.xlane.f32.xlu0 %v57
  %v59 = vpop.xlane.xlu0 %58
  %v60 = vmul.f32 %v50, %v35
  %v61 = vmul.f32 %v53, %v35
  %v62 = vmul.f32 %v56, %v35
  %v63 = vmul.f32 %v59, %v35
  %v64 = vadd.f32 %v60, 1e-12
  %v65 = vadd.f32 %v61, 1e-12
  %v66 = vadd.f32 %v62, 1e-12
  %v67 = vadd.f32 %v63, 1e-12
  %v68 = vrsqrt.pop %v64
  %v69 = vrsqrt.pop %v65
  %v70 = vrsqrt.pop %v66
  %v71 = vrsqrt.pop %v67
  %v72 = vmul.f32 %v40, %v68
  %v73 = vmul.f32 %v41, %v69
  %v74 = vmul.f32 %v42, %v70
  %v75 = vmul.f32 %v43, %v71
  %v76 = vld [vmem:[%s1] sm:$0x1]
  %v78 = vlaneseq
  %v79 = vshrl.u32 %v78, 7
  %v80 = vsub.s32 0, %v79
  %v81 = vrot.slane %v76, %v80
  %v83 = vmul.f32 %v72, %v81
  %v84 = vmul.f32 %v73, %v81
  %v85 = vmul.f32 %v74, %v81
  %v86 = vmul.f32 %v75, %v81
  %v87 = vld [vmem:[%s2] sm:$0x1]
  %v89 = vlaneseq
  %v90 = vshrl.u32 %v89, 7
  %v91 = vsub.s32 0, %v90
  %v92 = vrot.slane %v87, %v91
  %v94 = vadd.f32 %v83, %v92
  %v95 = vadd.f32 %v84, %v92
  %v96 = vadd.f32 %v85, %v92
  %v97 = vadd.f32 %v86, %v92
  %98 = vst.msk [vmem:[%s3] sm:$0xff] %vm22, %v94
  %99 = vst.msk [vmem:[%s3 + $0x8] sm:$0xff] %vm22, %v95
  %100 = vst.msk [vmem:[%s3 + $0x10] sm:$0xff] %vm22, %v96
  %101 = vst.msk [vmem:[%s3 + $0x18] sm:$0xff] %vm22, %v97
  // Predicated region
  $region14: #{_lambda_.23} parent=0 // pred_check
    _
  $region15: #{_lambda_.23} parent=0 // pred_check_branch
    %103 = sbr.rel (0) target = $region17
  $region16: #{_lambda_.23} parent=0 // pred_region
    _
  $region17: #{_lambda_.23} parent=0 // pred_fallthru
    _
  // Predicated region
  $region18: #{_lambda_.23} parent=0 // pred_check
    _
  $region19: #{_lambda_.23} parent=0 // pred_check_branch
    %105 = sbr.rel (0) target = $region21
  $region20: #{_lambda_.23} parent=0 // pred_region
    _
  $region21: #{_lambda_.23} parent=0 // pred_fallthru
    _

</llo_original>
